<compile_context>
chip_gen: v7x
topology: tpu7x:2x2x1
jax: 0.10.0
libtpu: 0.0.40
codegen_flags: <defaults>
</compile_context>

<pallas_src>
import functools
import math
from typing import NamedTuple

import jax
import jax.numpy as jnp
from jax.experimental import pallas as pl
from jax.experimental.pallas import tpu as pltpu


def _round_up(x, m):
    return ((x + m - 1) // m) * m


class Dims(NamedTuple):
    d_in: int
    H: int
    ED: int
    N: int
    K: int
    dt_rank: int
    Dp: int
    Hp: int
    EDp: int
    DRp: int


# --------------------------------------------------------------------------------------
# Pallas kernel: one decode step per grid point, state carried in VMEM scratch over time
# --------------------------------------------------------------------------------------
def _mamba_cell_kernel(
    K, hidden_true, rms_eps,
    # inputs
    x_ref, h0_ref, ci0_ref,
    w_in_ref, rms_w_ref, w_bxz_ref,
    w_conv_ref, b_conv_ref,
    w_B_ref, w_C_ref, w_dlt1_ref, w_dlt2_ref, b_dt_ref,
    negA_ref, D_ref, w_out_ref,
    # outputs
    y_ref, h_out_ref, ci_out_ref,
    # scratch: recurrent state carried across the time ('arbitrary') grid axis
    h_sc, ci_sc,
):
    f32 = jnp.float32
    t = pl.program_id(1)

    def _silu(v):
        return v / (1.0 + jnp.exp(-v))

    def _softplus(v):  # numerically stable, matches F.softplus
        return jnp.maximum(v, 0.0) + jnp.log(1.0 + jnp.exp(-jnp.abs(v)))

    # Initialize the VMEM-resident state from HBM state (fetched once per batch block).
    @pl.when(t == 0)
    def _():
        h_sc[...] = h0_ref[...].astype(f32)
        ci_sc[...] = ci0_ref[...].astype(f32)

    wdt = w_in_ref.dtype                       # matmul weight dtype (f32 or bf16)
    x_t = x_ref[...].astype(f32)               # (Bb, Dp)
    h = h_sc[...]                              # (Bb, N, EDp)   SSM state
    ci = ci_sc[...]                            # (Bb, K-1, EDp) conv cache (read first!)

    # ---- MambaCell.in_proj (bias=False) ----
    x_in = jnp.dot(x_t.astype(wdt), w_in_ref[...], preferred_element_type=f32)     # (Bb, Hp)

    # ---- RMSNorm over the TRUE hidden width (padded lanes are exactly zero) ----
    ms = jnp.sum(x_in * x_in, axis=-1, keepdims=True) * (1.0 / hidden_true)
    xn = x_in * jax.lax.rsqrt(ms + rms_eps) * rms_w_ref[...]

    # ---- mixer.in_proj: single fused matmul, lane-aligned split into x / z branches ----
    edp = w_conv_ref.shape[1]
    xz = jnp.dot(xn.astype(wdt), w_bxz_ref[...], preferred_element_type=f32)       # (Bb, 2*EDp)
    xb = xz[:, :edp]
    z = xz[:, edp:]

    # ---- depthwise causal conv step: unrolled weighted sum of taps (no concat) ----
    w_conv = w_conv_ref[...]
    x_conv = xb * w_conv[K - 1:K, :] + b_conv_ref[...]
    for k in range(K - 1):                     # static unroll, K is small
        x_conv = x_conv + ci[:, k, :] * w_conv[k:k + 1, :]
    xc = _silu(x_conv)                                                             # (Bb, EDp)

    # ---- selective-SSM parameterization ----
    xcw = xc.astype(wdt)
    Bm = jnp.dot(xcw, w_B_ref[...], preferred_element_type=f32)                    # (Bb, N)
    Cm = jnp.dot(xcw, w_C_ref[...], preferred_element_type=f32)                    # (Bb, N)
    # low-rank delta path kept as TWO matmuls (dt_rank padded to a 128-lane multiple)
    dlt_lr = jnp.dot(xcw, w_dlt1_ref[...], preferred_element_type=f32)             # (Bb, DRp)
    delta = _softplus(
        jnp.dot(dlt_lr.astype(wdt), w_dlt2_ref[...], preferred_element_type=f32)
        + b_dt_ref[...])                                                           # (Bb, EDp)

    # ---- selective scan single step (f32) ----
    # negA = -exp(A_log) precomputed; dxc factored once (saves one (B,N,ED) multiply).
    dA = jnp.exp(delta[:, None, :] * negA_ref[...][None, :, :])                    # (Bb, N, EDp)
    dxc = delta * xc                                                               # (Bb, EDp)
    h_new = dA * h + Bm[:, :, None] * dxc[:, None, :]                              # (Bb, N, EDp)
    y_ssm = jnp.sum(h_new * Cm[:, :, None], axis=1) + D_ref[...] * xc              # (Bb, EDp)

    # ---- gate, out_proj (bias=False), residual ----
    out = jnp.dot((y_ssm * _silu(z)).astype(wdt), w_out_ref[...],
                  preferred_element_type=f32)
    y_ref[...] = (out + x_in).astype(y_ref.dtype)

    # ---- carry state in VMEM scratch across time steps ----
    h_sc[...] = h_new
    if K > 2:
        ci_sc[:, :K - 2, :] = ci[:, 1:, :]
    ci_sc[:, K - 2:K - 1, :] = xb[:, None, :]

    # final state writeback (HBM buffers aliased to the input state -> in-place update)
    @pl.when(t == pl.num_programs(1) - 1)
    def _():
        h_out_ref[...] = h_sc[...].astype(h_out_ref.dtype)
        ci_out_ref[...] = ci_sc[...].astype(ci_out_ref.dtype)


# --------------------------------------------------------------------------------------
# Chunked decode wrapper: T steps per pallas_call, state kept in kernel layout
# --------------------------------------------------------------------------------------
def mamba_cell_decode(params, dims, x_seq, h, ci, *, rms_eps=1e-5, batch_block=None):
    """Run T decode steps in one pallas_call.

    x_seq : (T, B, d_in) ; h : (B, N, EDp) f32 ; ci : (B, K-1, EDp) f32
    Returns (y_seq (T, B, H), h_new, ci_new) with the state kept in kernel layout.
    """
    T, B, d_in = x_seq.shape
    d = dims
    if d_in < d.Dp:
        x_seq = jnp.pad(x_seq, ((0, 0), (0, 0), (0, d.Dp - d_in)))

    bb = B if batch_block is None else batch_block
    assert B % bb == 0 and (bb == B or bb % 8 == 0)
    nb = B // bb

    kernel = functools.partial(_mamba_cell_kernel, d.K, float(d.H), rms_eps)

    def _wspec(shape):  # whole-weight block, constant index -> DMA'd once, stays resident
        nd = len(shape)
        return pl.BlockSpec(shape, lambda b, t, _nd=nd: (0,) * _nd)

    weight_names = ('w_in', 'rms_w', 'w_bxz', 'w_conv', 'b_conv', 'w_B', 'w_C',
                    'w_dlt1', 'w_dlt2', 'b_dt', 'negA', 'D', 'w_out')

    in_specs = [
        pl.BlockSpec((pl.Squeezed(), bb, d.Dp), lambda b, t: (t, b, 0)),   # x_t
        pl.BlockSpec((bb, d.N, d.EDp), lambda b, t: (b, 0, 0)),            # h0
        pl.BlockSpec((bb, d.K - 1, d.EDp), lambda b, t: (b, 0, 0)),        # conv cache
    ] + [_wspec(params[n].shape) for n in weight_names]

    out_specs = (
        pl.BlockSpec((pl.Squeezed(), bb, d.Hp), lambda b, t: (t, b, 0)),   # y_t (lane-dense)
        pl.BlockSpec((bb, d.N, d.EDp), lambda b, t: (b, 0, 0)),            # h_new
        pl.BlockSpec((bb, d.K - 1, d.EDp), lambda b, t: (b, 0, 0)),        # conv cache new
    )

    y_pad, h_new, ci_new = pl.pallas_call(
        kernel,
        grid=(nb, T),
        in_specs=in_specs,
        out_specs=out_specs,
        out_shape=(
            jax.ShapeDtypeStruct((T, B, d.Hp), x_seq.dtype),
            jax.ShapeDtypeStruct((B, d.N, d.EDp), h.dtype),
            jax.ShapeDtypeStruct((B, d.K - 1, d.EDp), ci.dtype),
        ),
        scratch_shapes=[
            pltpu.VMEM((bb, d.N, d.EDp), jnp.float32),
            pltpu.VMEM((bb, d.K - 1, d.EDp), jnp.float32),
        ],
        # recurrent state updated in place: h -> h_new, conv cache -> new conv cache
        input_output_aliases={1: 1, 2: 2},
        compiler_params=pltpu.CompilerParams(
            dimension_semantics=("parallel", "arbitrary")),
    )(x_seq, h, ci, *[params[n] for n in weight_names])

    return y_pad[:, :, :d.H], h_new, ci_new


# --------------------------------------------------------------------------------------
# State layout converters (torch flat layout ONLY at the API boundary)
# --------------------------------------------------------------------------------------
def init_kernel_state(B, dims, dtype=jnp.float32):
    return (jnp.zeros((B, dims.N, dims.EDp), dtype),
            jnp.zeros((B, dims.K - 1, dims.EDp), dtype))


def flat_to_kernel_state(flat_state, dims):
    B = flat_state.shape[0]
    d = dims
    flat_h = d.ED * d.N
    h = flat_state[:, :flat_h].reshape(B, d.ED, d.N).transpose(0, 2, 1)
    ci = flat_state[:, flat_h:].reshape(B, d.ED, d.K - 1).transpose(0, 2, 1)
    pad = ((0, 0), (0, 0), (0, d.EDp - d.ED))
    return (jnp.pad(h, pad).astype(jnp.float32),
            jnp.pad(ci, pad).astype(jnp.float32))


def kernel_state_to_flat(h, ci, dims, dtype):
    B = h.shape[0]
    d = dims
    hf = h[:, :, :d.ED].transpose(0, 2, 1).reshape(B, d.ED * d.N)
    cf = ci[:, :, :d.ED].transpose(0, 2, 1).reshape(B, d.ED * (d.K - 1))
    return jnp.concatenate([hf, cf], axis=1).astype(dtype)


def mamba_cell_forward(params, dims, x_t, flat_state, *, rms_eps=1e-5):
    """PyTorch MambaCell.forward equivalent: (x_t, flat_state) -> (y_t, flat_state_new)."""
    B = x_t.shape[0]
    if flat_state is None or flat_state.size == 0:
        h, ci = init_kernel_state(B, dims)            # warm-up path: zero state
    else:
        h, ci = flat_to_kernel_state(flat_state, dims)
    y_seq, h, ci = mamba_cell_decode(params, dims, x_t[None], h, ci, rms_eps=rms_eps)
    return y_seq[0], kernel_state_to_flat(h, ci, dims, x_t.dtype)


# --------------------------------------------------------------------------------------
# Parameters (torch-shaped) and TPU packing (transpose / pad / fuse / precompute)
# --------------------------------------------------------------------------------------
def init_torch_params(key, input_size, hidden_size, d_state, d_conv):
    """Synthetic parameters in the PyTorch module's native shapes."""
    H, N, K = hidden_size, d_state, d_conv
    ED = 2 * H                                    # expand_factor = 2
    dt_rank = max(1, math.ceil(H / 16))
    ks = jax.random.split(key, 8)

    def w(k, shape, scale=0.1):
        return scale * jax.random.normal(k, shape, dtype=jnp.float32)

    A = jnp.tile(jnp.arange(1, N + 1, dtype=jnp.float32)[None, :], (ED, 1))  # (ED, N)
    return {
        'in_proj_w':     w(ks[0], (H, input_size)),        # MambaCell.in_proj (no bias)
        'norm_w':        jnp.ones((H,), jnp.float32),      # RMSNorm weight
        'blk_in_proj_w': w(ks[1], (2 * ED, H)),            # mixer.in_proj (no bias)
        'conv_w':        w(ks[2], (ED, 1, K)),             # depthwise conv1d weight
        'conv_b':        w(ks[3], (ED,), 0.05),            # conv1d bias
        'x_proj_w':      w(ks[4], (dt_rank + 2 * N, ED)),  # mixer.x_proj (no bias)
        'dt_proj_w':     w(ks[5], (ED, dt_rank), 0.5),     # mixer.dt_proj
        'dt_proj_b':     w(ks[6], (ED,), 0.1),
        'A_log':         jnp.log(A),                       # (ED, N)
        'D':             jnp.ones((ED,), jnp.float32),
        'out_proj_w':    w(ks[7], (H, ED)),                # mixer.out_proj (no bias)
    }


def pack_params(tp, *, param_dtype=jnp.float32, lane=128):
    """Transpose to (in, out), zero-pad lane dims to 128 multiples, fuse the x/z
    projection (lane-aligned split), keep the low-rank dt path un-fused, precompute
    negA = -exp(A_log), and optionally cast matmul weights to bf16."""
    ED, N = tp['A_log'].shape
    H, d_in = tp['in_proj_w'].shape
    K = tp['conv_w'].shape[-1]
    dt_rank = tp['dt_proj_w'].shape[1]

    Dp, Hp = _round_up(d_in, lane), _round_up(H, lane)
    EDp, DRp = _round_up(ED, lane), _round_up(dt_rank, lane)
    dims = Dims(d_in, H, ED, N, K, dt_rank, Dp, Hp, EDp, DRp)

    def padm(w, rows, cols):  # zero-pad a 2-D (in, out) matrix
        return jnp.pad(w, ((0, rows - w.shape[0]), (0, cols - w.shape[1])))

    xw = tp['x_proj_w']                                     # (dt_rank + 2N, ED)
    w_bx = padm(tp['blk_in_proj_w'][:ED, :].T, Hp, EDp)     # x branch
    w_bz = padm(tp['blk_in_proj_w'][ED:, :].T, Hp, EDp)     # z branch
    negA = -jnp.exp(tp['A_log']).T                          # (N, ED), precomputed constant

    params = {
        'w_in':   padm(tp['in_proj_w'].T, Dp, Hp).astype(param_dtype),
        'rms_w':  padm(tp['norm_w'][None, :], 1, Hp),
        'w_bxz':  jnp.concatenate([w_bx, w_bz], axis=1).astype(param_dtype),
        'w_conv': padm(tp['conv_w'][:, 0, :].T, K, EDp),
        'b_conv': padm(tp['conv_b'][None, :], 1, EDp),
        'w_B':    padm(xw[dt_rank:dt_rank + N, :].T, EDp, N).astype(param_dtype),
        'w_C':    padm(xw[dt_rank + N:, :].T, EDp, N).astype(param_dtype),
        'w_dlt1': padm(xw[:dt_rank, :].T, EDp, DRp).astype(param_dtype),
        'w_dlt2': padm(tp['dt_proj_w'].T, DRp, EDp).astype(param_dtype),
        'b_dt':   padm(tp['dt_proj_b'][None, :], 1, EDp),
        'negA':   padm(negA, N, EDp),
        'D':      padm(tp['D'][None, :], 1, EDp),
        'w_out':  padm(tp['out_proj_w'].T, EDp, Hp).astype(param_dtype),
    }
    return params, dims


# --------------------------------------------------------------------------------------
# Pure-JAX reference of the PyTorch module (for correctness checking)
# --------------------------------------------------------------------------------------
def mamba_cell_reference(tp, x_t, flat_state, *, d_state, d_conv, rms_eps=1e-5):
    B = x_t.shape[0]
    ED, N = tp['A_log'].shape
    K = d_conv
    dt_rank = tp['dt_proj_w'].shape[1]
    flat_h = ED * N

    x_in = x_t @ tp['in_proj_w'].T
    if flat_state is None or flat_state.size == 0:
        h = jnp.zeros((B, ED, N), x_t.dtype)
        inp = jnp.zeros((B, ED, K - 1), x_t.dtype)
    else:
        h = flat_state[:, :flat_h].reshape(B, ED, N)
        inp = flat_state[:, flat_h:].reshape(B, ED, K - 1)

    xn = x_in * jax.lax.rsqrt(jnp.mean(x_in ** 2, -1, keepdims=True) + rms_eps) * tp['norm_w']
    xz = xn @ tp['blk_in_proj_w'].T
    xb, z = xz[:, :ED], xz[:, ED:]
    window = jnp.concatenate([inp, xb[:, :, None]], axis=2)                   # (B, ED, K)
    x_conv = jnp.sum(window * tp['conv_w'][None, :, 0, :], axis=2) + tp['conv_b']
    xc = x_conv * jax.nn.sigmoid(x_conv)

    dbc = xc @ tp['x_proj_w'].T
    delta_r, Bm, Cm = dbc[:, :dt_rank], dbc[:, dt_rank:dt_rank + N], dbc[:, dt_rank + N:]
    delta = jax.nn.softplus(delta_r @ tp['dt_proj_w'].T + tp['dt_proj_b'])
    A = -jnp.exp(tp['A_log'])
    dA = jnp.exp(delta[:, :, None] * A[None])
    dBx = delta[:, :, None] * Bm[:, None, :] * xc[:, :, None]
    h_new = dA * h + dBx
    y = jnp.sum(h_new * Cm[:, None, :], axis=2) + tp['D'] * xc
    out = (y * (z * jax.nn.sigmoid(z))) @ tp['out_proj_w'].T + x_in
    inp_new = jnp.concatenate([inp[:, :, 1:], xb[:, :, None]], axis=2)
    flat_new = jnp.concatenate([h_new.reshape(B, -1), inp_new.reshape(B, -1)], axis=1)
    return out, flat_new


# --------------------------------------------------------------------------------------
if __name__ == "__main__":
    B, D_IN, H, D_STATE, D_CONV = 2, 16, 32, 16, 4
    ED = 2 * H
    MEM = ED * D_STATE + ED * (D_CONV - 1)        # 1024 + 192 = 1216
    T = 8

    key = jax.random.PRNGKey(0)
    kx, ks, kp, kq = jax.random.split(key, 4)
    x_t = jax.random.normal(kx, (B, D_IN), dtype=jnp.float32)
    flat_state = 0.1 * jax.random.normal(ks, (B, MEM), dtype=jnp.float32)
    x_seq = jax.random.normal(kq, (T, B, D_IN), dtype=jnp.float32)

    tp = init_torch_params(kp, D_IN, H, D_STATE, D_CONV)
    ref = functools.partial(mamba_cell_reference, d_state=D_STATE, d_conv=D_CONV)

    # ---------------- f32 weights: strict single-step check (warm-up + steady) ---------
    params32, dims = pack_params(tp, param_dtype=jnp.float32)
    y0, s0 = mamba_cell_forward(params32, dims, x_t, None)
    y1, s1 = mamba_cell_forward(params32, dims, x_t, flat_state)
    jax.block_until_ready((y0, s0, y1, s1))

    ry0, rs0 = ref(tp, x_t, None)
    ry1, rs1 = ref(tp, x_t, flat_state)
    assert y1.shape == (B, H) and s1.shape == (B, MEM)
    for got, want in ((y0, ry0), (s0, rs0), (y1, ry1), (s1, rs1)):
        assert bool(jnp.all(jnp.isfinite(got)))
        assert bool(jnp.allclose(got, want, rtol=1e-4, atol=1e-4)), \
            float(jnp.max(jnp.abs(got - want)))

    # ---------------- T-step decode chunk: weights resident across all steps -----------
    h, ci = flat_to_kernel_state(flat_state, dims)
    y_seq, h, ci = mamba_cell_decode(params32, dims, x_seq, h, ci)
    s_chunk = kernel_state_to_flat(h, ci, dims, x_t.dtype)
    jax.block_until_ready((y_seq, s_chunk))

    s_ref = flat_state
    ys_ref = []
    for t in range(T):
        y_r, s_ref = ref(tp, x_seq[t], s_ref)
        ys_ref.append(y_r)
    ys_ref = jnp.stack(ys_ref, axis=0)
    assert y_seq.shape == (T, B, H)
    assert bool(jnp.allclose(y_seq, ys_ref, rtol=5e-4, atol=5e-4)), \
        float(jnp.max(jnp.abs(y_seq - ys_ref)))
    assert bool(jnp.allclose(s_chunk, s_ref, rtol=5e-4, atol=5e-4)), \
        float(jnp.max(jnp.abs(s_chunk - s_ref)))

    # ---------------- bf16 matmul weights (halved weight DMA), loose tolerance ---------
    params_bf16, dims_b = pack_params(tp, param_dtype=jnp.bfloat16)
    yb, sb = mamba_cell_forward(params_bf16, dims_b, x_t, flat_state)
    jax.block_until_ready((yb, sb))
    assert bool(jnp.all(jnp.isfinite(yb))) and bool(jnp.all(jnp.isfinite(sb)))
    assert bool(jnp.allclose(yb, ry1, rtol=5e-2, atol=5e-2)), \
        float(jnp.max(jnp.abs(yb - ry1)))

    print("KERNEL_OK")
</pallas_src>

<mosaic_0001>
module attributes {stable_mosaic.version = 11 : i64} {
  func.func @_mamba_cell_kernel(%arg0: i32, %arg1: i32, %arg2: memref<1x2x128xf32, #tpu.memory_space<vmem>>, %arg3: memref<2x16x128xf32, #tpu.memory_space<vmem>>, %arg4: memref<2x3x128xf32, #tpu.memory_space<vmem>>, %arg5: memref<128x128xf32, #tpu.memory_space<vmem>>, %arg6: memref<1x128xf32, #tpu.memory_space<vmem>>, %arg7: memref<128x256xf32, #tpu.memory_space<vmem>>, %arg8: memref<4x128xf32, #tpu.memory_space<vmem>>, %arg9: memref<1x128xf32, #tpu.memory_space<vmem>>, %arg10: memref<128x16xf32, #tpu.memory_space<vmem>>, %arg11: memref<128x16xf32, #tpu.memory_space<vmem>>, %arg12: memref<128x128xf32, #tpu.memory_space<vmem>>, %arg13: memref<128x128xf32, #tpu.memory_space<vmem>>, %arg14: memref<1x128xf32, #tpu.memory_space<vmem>>, %arg15: memref<16x128xf32, #tpu.memory_space<vmem>>, %arg16: memref<1x128xf32, #tpu.memory_space<vmem>>, %arg17: memref<128x128xf32, #tpu.memory_space<vmem>>, %arg18: memref<1x2x128xf32, #tpu.memory_space<vmem>>, %arg19: memref<2x16x128xf32, #tpu.memory_space<vmem>>, %arg20: memref<2x3x128xf32, #tpu.memory_space<vmem>>, %arg21: memref<2x16x128xf32, #tpu.memory_space<vmem>>, %arg22: memref<2x3x128xf32, #tpu.memory_space<vmem>>) attributes {dimension_semantics = [#tpu.dimension_semantics<parallel>, #tpu.dimension_semantics<arbitrary>], iteration_bounds = array<i64: 1, 1>, scalar_prefetch = 0 : i64, scratch_operands = 2 : i64, tpu.core_type = #tpu.core_type<tc>, window_params = [{transform_indices = @transform_0, window_bounds = array<i64: 1, 2, 128>}, {transform_indices = @transform_1, window_bounds = array<i64: 2, 16, 128>}, {transform_indices = @transform_2, window_bounds = array<i64: 2, 3, 128>}, {pipeline_mode = #tpu.pipeline_mode<synchronous>, transform_indices = @transform_3, window_bounds = array<i64: 128, 128>}, {pipeline_mode = #tpu.pipeline_mode<synchronous>, transform_indices = @transform_4, window_bounds = array<i64: 1, 128>}, {pipeline_mode = #tpu.pipeline_mode<synchronous>, transform_indices = @transform_5, window_bounds = array<i64: 128, 256>}, {pipeline_mode = #tpu.pipeline_mode<synchronous>, transform_indices = @transform_6, window_bounds = array<i64: 4, 128>}, {pipeline_mode = #tpu.pipeline_mode<synchronous>, transform_indices = @transform_7, window_bounds = array<i64: 1, 128>}, {pipeline_mode = #tpu.pipeline_mode<synchronous>, transform_indices = @transform_8, window_bounds = array<i64: 128, 16>}, {pipeline_mode = #tpu.pipeline_mode<synchronous>, transform_indices = @transform_9, window_bounds = array<i64: 128, 16>}, {pipeline_mode = #tpu.pipeline_mode<synchronous>, transform_indices = @transform_10, window_bounds = array<i64: 128, 128>}, {pipeline_mode = #tpu.pipeline_mode<synchronous>, transform_indices = @transform_11, window_bounds = array<i64: 128, 128>}, {pipeline_mode = #tpu.pipeline_mode<synchronous>, transform_indices = @transform_12, window_bounds = array<i64: 1, 128>}, {pipeline_mode = #tpu.pipeline_mode<synchronous>, transform_indices = @transform_13, window_bounds = array<i64: 16, 128>}, {pipeline_mode = #tpu.pipeline_mode<synchronous>, transform_indices = @transform_14, window_bounds = array<i64: 1, 128>}, {pipeline_mode = #tpu.pipeline_mode<synchronous>, transform_indices = @transform_15, window_bounds = array<i64: 128, 128>}, {transform_indices = @transform_16, window_bounds = array<i64: 1, 2, 128>}, {transform_indices = @transform_17, window_bounds = array<i64: 2, 16, 128>}, {transform_indices = @transform_18, window_bounds = array<i64: 2, 3, 128>}]} {
    %c0_i32 = arith.constant 0 : i32
    %0 = arith.cmpi eq, %arg1, %c0_i32 : i32
    %1 = arith.extui %0 : i1 to i32
    %c0_i32_0 = arith.constant 0 : i32
    %2 = arith.cmpi ne, %1, %c0_i32_0 : i32
    scf.if %2 {
      %c0_65 = arith.constant 0 : index
      %c0_66 = arith.constant 0 : index
      %c0_67 = arith.constant 0 : index
      %122 = vector.load %arg3[%c0_65, %c0_66, %c0_67] : memref<2x16x128xf32, #tpu.memory_space<vmem>>, vector<2x16x128xf32>
      %c0_68 = arith.constant 0 : index
      %c0_69 = arith.constant 0 : index
      %c0_70 = arith.constant 0 : index
      %123 = vector.load %arg21[%c0_68, %c0_69, %c0_70] : memref<2x16x128xf32, #tpu.memory_space<vmem>>, vector<2x16x128xf32>
      tpu.vector_store %arg21[%c0_68, %c0_69, %c0_70], %122 {strides = array<i32>} : memref<2x16x128xf32, #tpu.memory_space<vmem>>, vector<2x16x128xf32>,
      %c0_71 = arith.constant 0 : index
      %c0_72 = arith.constant 0 : index
      %c0_73 = arith.constant 0 : index
      %124 = vector.load %arg4[%c0_71, %c0_72, %c0_73] : memref<2x3x128xf32, #tpu.memory_space<vmem>>, vector<2x3x128xf32>
      %c0_74 = arith.constant 0 : index
      %c0_75 = arith.constant 0 : index
      %c0_76 = arith.constant 0 : index
      %125 = vector.load %arg22[%c0_74, %c0_75, %c0_76] : memref<2x3x128xf32, #tpu.memory_space<vmem>>, vector<2x3x128xf32>
      tpu.vector_store %arg22[%c0_74, %c0_75, %c0_76], %124 {strides = array<i32>} : memref<2x3x128xf32, #tpu.memory_space<vmem>>, vector<2x3x128xf32>,
    } else {
    }
    %c0 = arith.constant 0 : index
    %c0_1 = arith.constant 0 : index
    %c0_2 = arith.constant 0 : index
    %3 = vector.load %arg2[%c0, %c0_1, %c0_2] : memref<1x2x128xf32, #tpu.memory_space<vmem>>, vector<1x2x128xf32>
    %4 = vector.shape_cast %3 : vector<1x2x128xf32> to vector<2x128xf32>
    %c0_3 = arith.constant 0 : index
    %c0_4 = arith.constant 0 : index
    %c0_5 = arith.constant 0 : index
    %5 = vector.load %arg21[%c0_3, %c0_4, %c0_5] : memref<2x16x128xf32, #tpu.memory_space<vmem>>, vector<2x16x128xf32>
    %c0_6 = arith.constant 0 : index
    %c0_7 = arith.constant 0 : index
    %c0_8 = arith.constant 0 : index
    %6 = vector.load %arg22[%c0_6, %c0_7, %c0_8] : memref<2x3x128xf32, #tpu.memory_space<vmem>>, vector<2x3x128xf32>
    %c0_9 = arith.constant 0 : index
    %c0_10 = arith.constant 0 : index
    %7 = vector.load %arg5[%c0_9, %c0_10] : memref<128x128xf32, #tpu.memory_space<vmem>>, vector<128x128xf32>
    %cst = arith.constant dense<0.000000e+00> : vector<2x128xf32>
    %8 = tpu.matmul %4, %7, %cst {dimension_numbers = #tpu.dot_dimension_numbers<[1], [0], [0], [1], [0, 0, 1, 1], [], []>} : vector<2x128xf32>, vector<128x128xf32>, vector<2x128xf32> -> vector<2x128xf32>
    %9 = arith.mulf %8, %8 : vector<2x128xf32>
    %cst_11 = arith.constant dense<0.000000e+00> : vector<2xf32>
    %10 = vector.multi_reduction <add>, %9, %cst_11 [1] : vector<2x128xf32> to vector<2xf32>
    %11 = vector.shape_cast %10 : vector<2xf32> to vector<2x1xf32>
    %cst_12 = arith.constant 3.125000e-02 : f32
    %12 = vector.broadcast %cst_12 : f32 to vector<2x1xf32>
    %13 = arith.mulf %11, %12 : vector<2x1xf32>
    %cst_13 = arith.constant 9.99999974E-6 : f32
    %14 = vector.broadcast %cst_13 : f32 to vector<2x1xf32>
    %15 = arith.addf %13, %14 : vector<2x1xf32>
    %16 = math.rsqrt %15 : vector<2x1xf32>
    %17 = vector.broadcast %16 : vector<2x1xf32> to vector<2x128xf32>
    %18 = arith.mulf %8, %17 : vector<2x128xf32>
    %c0_14 = arith.constant 0 : index
    %c0_15 = arith.constant 0 : index
    %19 = vector.load %arg6[%c0_14, %c0_15] : memref<1x128xf32, #tpu.memory_space<vmem>>, vector<1x128xf32>
    %20 = vector.broadcast %19 : vector<1x128xf32> to vector<2x128xf32>
    %21 = arith.mulf %18, %20 : vector<2x128xf32>
    %c0_16 = arith.constant 0 : index
    %c0_17 = arith.constant 0 : index
    %22 = vector.load %arg7[%c0_16, %c0_17] : memref<128x256xf32, #tpu.memory_space<vmem>>, vector<128x256xf32>
    %cst_18 = arith.constant dense<0.000000e+00> : vector<2x256xf32>
    %23 = tpu.matmul %21, %22, %cst_18 {dimension_numbers = #tpu.dot_dimension_numbers<[1], [0], [0], [1], [0, 0, 1, 1], [], []>} : vector<2x128xf32>, vector<128x256xf32>, vector<2x256xf32> -> vector<2x256xf32>
    %24 = vector.extract_strided_slice %23 {offsets = [0, 0], sizes = [2, 128], strides = [1, 1]} : vector<2x256xf32> to vector<2x128xf32>
    %25 = vector.extract_strided_slice %23 {offsets = [0, 128], sizes = [2, 128], strides = [1, 1]} : vector<2x256xf32> to vector<2x128xf32>
    %c0_19 = arith.constant 0 : index
    %c0_20 = arith.constant 0 : index
    %26 = vector.load %arg8[%c0_19, %c0_20] : memref<4x128xf32, #tpu.memory_space<vmem>>, vector<4x128xf32>
    %27 = vector.extract_strided_slice %26 {offsets = [3, 0], sizes = [1, 128], strides = [1, 1]} : vector<4x128xf32> to vector<1x128xf32>
    %28 = vector.broadcast %27 : vector<1x128xf32> to vector<2x128xf32>
    %29 = arith.mulf %24, %28 : vector<2x128xf32>
    %c0_21 = arith.constant 0 : index
    %c0_22 = arith.constant 0 : index
    %30 = vector.load %arg9[%c0_21, %c0_22] : memref<1x128xf32, #tpu.memory_space<vmem>>, vector<1x128xf32>
    %31 = vector.broadcast %30 : vector<1x128xf32> to vector<2x128xf32>
    %32 = arith.addf %29, %31 : vector<2x128xf32>
    %33 = vector.extract_strided_slice %6 {offsets = [0, 0, 0], sizes = [2, 1, 128], strides = [1, 1, 1]} : vector<2x3x128xf32> to vector<2x1x128xf32>
    %34 = vector.shape_cast %33 : vector<2x1x128xf32> to vector<2x128xf32>
    %35 = vector.extract_strided_slice %26 {offsets = [0, 0], sizes = [1, 128], strides = [1, 1]} : vector<4x128xf32> to vector<1x128xf32>
    %36 = vector.broadcast %35 : vector<1x128xf32> to vector<2x128xf32>
    %37 = arith.mulf %34, %36 : vector<2x128xf32>
    %38 = arith.addf %32, %37 : vector<2x128xf32>
    %39 = vector.extract_strided_slice %6 {offsets = [0, 1, 0], sizes = [2, 1, 128], strides = [1, 1, 1]} : vector<2x3x128xf32> to vector<2x1x128xf32>
    %40 = vector.shape_cast %39 : vector<2x1x128xf32> to vector<2x128xf32>
    %41 = vector.extract_strided_slice %26 {offsets = [1, 0], sizes = [1, 128], strides = [1, 1]} : vector<4x128xf32> to vector<1x128xf32>
    %42 = vector.broadcast %41 : vector<1x128xf32> to vector<2x128xf32>
    %43 = arith.mulf %40, %42 : vector<2x128xf32>
    %44 = arith.addf %38, %43 : vector<2x128xf32>
    %45 = vector.extract_strided_slice %6 {offsets = [0, 2, 0], sizes = [2, 1, 128], strides = [1, 1, 1]} : vector<2x3x128xf32> to vector<2x1x128xf32>
    %46 = vector.shape_cast %45 : vector<2x1x128xf32> to vector<2x128xf32>
    %47 = vector.extract_strided_slice %26 {offsets = [2, 0], sizes = [1, 128], strides = [1, 1]} : vector<4x128xf32> to vector<1x128xf32>
    %48 = vector.broadcast %47 : vector<1x128xf32> to vector<2x128xf32>
    %49 = arith.mulf %46, %48 : vector<2x128xf32>
    %50 = arith.addf %44, %49 : vector<2x128xf32>
    %cst_23 = arith.constant 0.000000e+00 : f32
    %51 = vector.broadcast %cst_23 : f32 to vector<2x128xf32>
    %52 = arith.subf %51, %50 : vector<2x128xf32>
    %53 = math.exp %52 : vector<2x128xf32>
    %cst_24 = arith.constant 1.000000e+00 : f32
    %54 = vector.broadcast %cst_24 : f32 to vector<2x128xf32>
    %55 = arith.addf %54, %53 : vector<2x128xf32>
    %56 = arith.divf %50, %55 : vector<2x128xf32>
    %c0_25 = arith.constant 0 : index
    %c0_26 = arith.constant 0 : index
    %57 = vector.load %arg10[%c0_25, %c0_26] : memref<128x16xf32, #tpu.memory_space<vmem>>, vector<128x16xf32>
    %cst_27 = arith.constant dense<0.000000e+00> : vector<2x16xf32>
    %58 = tpu.matmul %56, %57, %cst_27 {dimension_numbers = #tpu.dot_dimension_numbers<[1], [0], [0], [1], [0, 0, 1, 1], [], []>} : vector<2x128xf32>, vector<128x16xf32>, vector<2x16xf32> -> vector<2x16xf32>
    %c0_28 = arith.constant 0 : index
    %c0_29 = arith.constant 0 : index
    %59 = vector.load %arg11[%c0_28, %c0_29] : memref<128x16xf32, #tpu.memory_space<vmem>>, vector<128x16xf32>
    %cst_30 = arith.constant dense<0.000000e+00> : vector<2x16xf32>
    %60 = tpu.matmul %56, %59, %cst_30 {dimension_numbers = #tpu.dot_dimension_numbers<[1], [0], [0], [1], [0, 0, 1, 1], [], []>} : vector<2x128xf32>, vector<128x16xf32>, vector<2x16xf32> -> vector<2x16xf32>
    %c0_31 = arith.constant 0 : index
    %c0_32 = arith.constant 0 : index
    %61 = vector.load %arg12[%c0_31, %c0_32] : memref<128x128xf32, #tpu.memory_space<vmem>>, vector<128x128xf32>
    %cst_33 = arith.constant dense<0.000000e+00> : vector<2x128xf32>
    %62 = tpu.matmul %56, %61, %cst_33 {dimension_numbers = #tpu.dot_dimension_numbers<[1], [0], [0], [1], [0, 0, 1, 1], [], []>} : vector<2x128xf32>, vector<128x128xf32>, vector<2x128xf32> -> vector<2x128xf32>
    %c0_34 = arith.constant 0 : index
    %c0_35 = arith.constant 0 : index
    %63 = vector.load %arg13[%c0_34, %c0_35] : memref<128x128xf32, #tpu.memory_space<vmem>>, vector<128x128xf32>
    %cst_36 = arith.constant dense<0.000000e+00> : vector<2x128xf32>
    %64 = tpu.matmul %62, %63, %cst_36 {dimension_numbers = #tpu.dot_dimension_numbers<[1], [0], [0], [1], [0, 0, 1, 1], [], []>} : vector<2x128xf32>, vector<128x128xf32>, vector<2x128xf32> -> vector<2x128xf32>
    %c0_37 = arith.constant 0 : index
    %c0_38 = arith.constant 0 : index
    %65 = vector.load %arg14[%c0_37, %c0_38] : memref<1x128xf32, #tpu.memory_space<vmem>>, vector<1x128xf32>
    %66 = vector.broadcast %65 : vector<1x128xf32> to vector<2x128xf32>
    %67 = arith.addf %64, %66 : vector<2x128xf32>
    %cst_39 = arith.constant 0.000000e+00 : f32
    %68 = vector.broadcast %cst_39 : f32 to vector<2x128xf32>
    %69 = arith.maximumf %67, %68 : vector<2x128xf32>
    %70 = math.absf %67 : vector<2x128xf32>
    %cst_40 = arith.constant 0.000000e+00 : f32
    %71 = vector.broadcast %cst_40 : f32 to vector<2x128xf32>
    %72 = arith.subf %71, %70 : vector<2x128xf32>
    %73 = math.exp %72 : vector<2x128xf32>
    %cst_41 = arith.constant 1.000000e+00 : f32
    %74 = vector.broadcast %cst_41 : f32 to vector<2x128xf32>
    %75 = arith.addf %74, %73 : vector<2x128xf32>
    %76 = math.log %75 : vector<2x128xf32>
    %77 = arith.addf %69, %76 : vector<2x128xf32>
    %78 = vector.shape_cast %77 : vector<2x128xf32> to vector<2x1x128xf32>
    %c0_42 = arith.constant 0 : index
    %c0_43 = arith.constant 0 : index
    %79 = vector.load %arg15[%c0_42, %c0_43] : memref<16x128xf32, #tpu.memory_space<vmem>>, vector<16x128xf32>
    %80 = vector.shape_cast %79 : vector<16x128xf32> to vector<1x16x128xf32>
    %81 = vector.broadcast %78 : vector<2x1x128xf32> to vector<2x16x128xf32>
    %82 = vector.broadcast %80 : vector<1x16x128xf32> to vector<2x16x128xf32>
    %83 = arith.mulf %81, %82 : vector<2x16x128xf32>
    %84 = math.exp %83 : vector<2x16x128xf32>
    %85 = arith.mulf %77, %56 : vector<2x128xf32>
    %86 = arith.mulf %84, %5 : vector<2x16x128xf32>
    %87 = vector.shape_cast %58 : vector<2x16xf32> to vector<2x16x1xf32>
    %88 = vector.shape_cast %85 : vector<2x128xf32> to vector<2x1x128xf32>
    %89 = vector.broadcast %87 : vector<2x16x1xf32> to vector<2x16x128xf32>
    %90 = vector.broadcast %88 : vector<2x1x128xf32> to vector<2x16x128xf32>
    %91 = arith.mulf %89, %90 : vector<2x16x128xf32>
    %92 = arith.addf %86, %91 : vector<2x16x128xf32>
    %93 = vector.shape_cast %60 : vector<2x16xf32> to vector<2x16x1xf32>
    %94 = vector.broadcast %93 : vector<2x16x1xf32> to vector<2x16x128xf32>
    %95 = arith.mulf %92, %94 : vector<2x16x128xf32>
    %cst_44 = arith.constant dense<0.000000e+00> : vector<2x128xf32>
    %96 = vector.multi_reduction <add>, %95, %cst_44 [1] : vector<2x16x128xf32> to vector<2x128xf32>
    %c0_45 = arith.constant 0 : index
    %c0_46 = arith.constant 0 : index
    %97 = vector.load %arg16[%c0_45, %c0_46] : memref<1x128xf32, #tpu.memory_space<vmem>>, vector<1x128xf32>
    %98 = vector.broadcast %97 : vector<1x128xf32> to vector<2x128xf32>
    %99 = arith.mulf %98, %56 : vector<2x128xf32>
    %100 = arith.addf %96, %99 : vector<2x128xf32>
    %cst_47 = arith.constant 0.000000e+00 : f32
    %101 = vector.broadcast %cst_47 : f32 to vector<2x128xf32>
    %102 = arith.subf %101, %25 : vector<2x128xf32>
    %103 = math.exp %102 : vector<2x128xf32>
    %cst_48 = arith.constant 1.000000e+00 : f32
    %104 = vector.broadcast %cst_48 : f32 to vector<2x128xf32>
    %105 = arith.addf %104, %103 : vector<2x128xf32>
    %106 = arith.divf %25, %105 : vector<2x128xf32>
    %107 = arith.mulf %100, %106 : vector<2x128xf32>
    %c0_49 = arith.constant 0 : index
    %c0_50 = arith.constant 0 : index
    %108 = vector.load %arg17[%c0_49, %c0_50] : memref<128x128xf32, #tpu.memory_space<vmem>>, vector<128x128xf32>
    %cst_51 = arith.constant dense<0.000000e+00> : vector<2x128xf32>
    %109 = tpu.matmul %107, %108, %cst_51 {dimension_numbers = #tpu.dot_dimension_numbers<[1], [0], [0], [1], [0, 0, 1, 1], [], []>} : vector<2x128xf32>, vector<128x128xf32>, vector<2x128xf32> -> vector<2x128xf32>
    %110 = arith.addf %109, %8 : vector<2x128xf32>
    %c0_52 = arith.constant 0 : index
    %c0_53 = arith.constant 0 : index
    %c0_54 = arith.constant 0 : index
    %111 = vector.load %arg18[%c0_52, %c0_53, %c0_54] : memref<1x2x128xf32, #tpu.memory_space<vmem>>, vector<1x2x128xf32>
    %112 = vector.shape_cast %111 : vector<1x2x128xf32> to vector<2x128xf32>
    %113 = vector.shape_cast %110 : vector<2x128xf32> to vector<1x2x128xf32>
    tpu.vector_store %arg18[%c0_52, %c0_53, %c0_54], %113 {strides = array<i32>} : memref<1x2x128xf32, #tpu.memory_space<vmem>>, vector<1x2x128xf32>,
    %c0_55 = arith.constant 0 : index
    %c0_56 = arith.constant 0 : index
    %c0_57 = arith.constant 0 : index
    %114 = vector.load %arg21[%c0_55, %c0_56, %c0_57] : memref<2x16x128xf32, #tpu.memory_space<vmem>>, vector<2x16x128xf32>
    tpu.vector_store %arg21[%c0_55, %c0_56, %c0_57], %92 {strides = array<i32>} : memref<2x16x128xf32, #tpu.memory_space<vmem>>, vector<2x16x128xf32>,
    %115 = vector.extract_strided_slice %6 {offsets = [0, 1, 0], sizes = [2, 2, 128], strides = [1, 1, 1]} : vector<2x3x128xf32> to vector<2x2x128xf32>
    %c0_58 = arith.constant 0 : index
    %c0_59 = arith.constant 0 : index
    %c0_60 = arith.constant 0 : index
    %116 = vector.load %arg22[%c0_58, %c0_59, %c0_60] : memref<2x3x128xf32, #tpu.memory_space<vmem>>, vector<2x2x128xf32>
    tpu.vector_store %arg22[%c0_58, %c0_59, %c0_60], %115 {strides = array<i32>} : memref<2x3x128xf32, #tpu.memory_space<vmem>>, vector<2x2x128xf32>,
    %117 = vector.shape_cast %24 : vector<2x128xf32> to vector<2x1x128xf32>
    %c0_61 = arith.constant 0 : index
    %c2 = arith.constant 2 : index
    %c0_62 = arith.constant 0 : index
    %118 = vector.load %arg22[%c0_61, %c2, %c0_62] : memref<2x3x128xf32, #tpu.memory_space<vmem>>, vector<2x1x128xf32>
    tpu.vector_store %arg22[%c0_61, %c2, %c0_62], %117 {strides = array<i32>} : memref<2x3x128xf32, #tpu.memory_space<vmem>>, vector<2x1x128xf32>,
    %c0_i32_63 = arith.constant 0 : i32
    %119 = arith.cmpi eq, %arg1, %c0_i32_63 : i32
    %120 = arith.extui %119 : i1 to i32
    %c0_i32_64 = arith.constant 0 : i32
    %121 = arith.cmpi ne, %120, %c0_i32_64 : i32
    scf.if %121 {
      %c0_65 = arith.constant 0 : index
      %c0_66 = arith.constant 0 : index
      %c0_67 = arith.constant 0 : index
      %122 = vector.load %arg21[%c0_65, %c0_66, %c0_67] : memref<2x16x128xf32, #tpu.memory_space<vmem>>, vector<2x16x128xf32>
      %c0_68 = arith.constant 0 : index
      %c0_69 = arith.constant 0 : index
      %c0_70 = arith.constant 0 : index
      %123 = vector.load %arg19[%c0_68, %c0_69, %c0_70] : memref<2x16x128xf32, #tpu.memory_space<vmem>>, vector<2x16x128xf32>
      tpu.vector_store %arg19[%c0_68, %c0_69, %c0_70], %122 {strides = array<i32>} : memref<2x16x128xf32, #tpu.memory_space<vmem>>, vector<2x16x128xf32>,
      %c0_71 = arith.constant 0 : index
      %c0_72 = arith.constant 0 : index
      %c0_73 = arith.constant 0 : index
      %124 = vector.load %arg22[%c0_71, %c0_72, %c0_73] : memref<2x3x128xf32, #tpu.memory_space<vmem>>, vector<2x3x128xf32>
      %c0_74 = arith.constant 0 : index
      %c0_75 = arith.constant 0 : index
      %c0_76 = arith.constant 0 : index
      %125 = vector.load %arg20[%c0_74, %c0_75, %c0_76] : memref<2x3x128xf32, #tpu.memory_space<vmem>>, vector<2x3x128xf32>
      tpu.vector_store %arg20[%c0_74, %c0_75, %c0_76], %124 {strides = array<i32>} : memref<2x3x128xf32, #tpu.memory_space<vmem>>, vector<2x3x128xf32>,
    } else {
    }
    return
  }
  func.func @transform_0(%arg0: i32, %arg1: i32) -> (i32, i32, i32) {
    %c0_i32 = arith.constant 0 : i32
    %c0_i32_0 = arith.constant 0 : i32
    return %arg1, %arg0, %c0_i32 : i32, i32, i32
  }
  func.func @transform_1(%arg0: i32, %arg1: i32) -> (i32, i32, i32) {
    %c0_i32 = arith.constant 0 : i32
    %c0_i32_0 = arith.constant 0 : i32
    %c0_i32_1 = arith.constant 0 : i32
    return %arg0, %c0_i32, %c0_i32_0 : i32, i32, i32
  }
  func.func @transform_2(%arg0: i32, %arg1: i32) -> (i32, i32, i32) {
    %c0_i32 = arith.constant 0 : i32
    %c0_i32_0 = arith.constant 0 : i32
    %c0_i32_1 = arith.constant 0 : i32
    return %arg0, %c0_i32, %c0_i32_0 : i32, i32, i32
  }
  func.func @transform_3(%arg0: i32, %arg1: i32) -> (i32, i32) {
    %c0_i32 = arith.constant 0 : i32
    %c0_i32_0 = arith.constant 0 : i32
    %c0_i32_1 = arith.constant 0 : i32
    return %c0_i32, %c0_i32_0 : i32, i32
  }
  func.func @transform_4(%arg0: i32, %arg1: i32) -> (i32, i32) {
    %c0_i32 = arith.constant 0 : i32
    %c0_i32_0 = arith.constant 0 : i32
    %c0_i32_1 = arith.constant 0 : i32
    return %c0_i32, %c0_i32_0 : i32, i32
  }
  func.func @transform_5(%arg0: i32, %arg1: i32) -> (i32, i32) {
    %c0_i32 = arith.constant 0 : i32
    %c0_i32_0 = arith.constant 0 : i32
    %c0_i32_1 = arith.constant 0 : i32
    return %c0_i32, %c0_i32_0 : i32, i32
  }
  func.func @transform_6(%arg0: i32, %arg1: i32) -> (i32, i32) {
    %c0_i32 = arith.constant 0 : i32
    %c0_i32_0 = arith.constant 0 : i32
    %c0_i32_1 = arith.constant 0 : i32
    return %c0_i32, %c0_i32_0 : i32, i32
  }
  func.func @transform_7(%arg0: i32, %arg1: i32) -> (i32, i32) {
    %c0_i32 = arith.constant 0 : i32
    %c0_i32_0 = arith.constant 0 : i32
    %c0_i32_1 = arith.constant 0 : i32
    return %c0_i32, %c0_i32_0 : i32, i32
  }
  func.func @transform_8(%arg0: i32, %arg1: i32) -> (i32, i32) {
    %c0_i32 = arith.constant 0 : i32
    %c0_i32_0 = arith.constant 0 : i32
    %c0_i32_1 = arith.constant 0 : i32
    return %c0_i32, %c0_i32_0 : i32, i32
  }
  func.func @transform_9(%arg0: i32, %arg1: i32) -> (i32, i32) {
    %c0_i32 = arith.constant 0 : i32
    %c0_i32_0 = arith.constant 0 : i32
    %c0_i32_1 = arith.constant 0 : i32
    return %c0_i32, %c0_i32_0 : i32, i32
  }
  func.func @transform_10(%arg0: i32, %arg1: i32) -> (i32, i32) {
    %c0_i32 = arith.constant 0 : i32
    %c0_i32_0 = arith.constant 0 : i32
    %c0_i32_1 = arith.constant 0 : i32
    return %c0_i32, %c0_i32_0 : i32, i32
  }
  func.func @transform_11(%arg0: i32, %arg1: i32) -> (i32, i32) {
    %c0_i32 = arith.constant 0 : i32
    %c0_i32_0 = arith.constant 0 : i32
    %c0_i32_1 = arith.constant 0 : i32
    return %c0_i32, %c0_i32_0 : i32, i32
  }
  func.func @transform_12(%arg0: i32, %arg1: i32) -> (i32, i32) {
    %c0_i32 = arith.constant 0 : i32
    %c0_i32_0 = arith.constant 0 : i32
    %c0_i32_1 = arith.constant 0 : i32
    return %c0_i32, %c0_i32_0 : i32, i32
  }
  func.func @transform_13(%arg0: i32, %arg1: i32) -> (i32, i32) {
    %c0_i32 = arith.constant 0 : i32
    %c0_i32_0 = arith.constant 0 : i32
    %c0_i32_1 = arith.constant 0 : i32
    return %c0_i32, %c0_i32_0 : i32, i32
  }
  func.func @transform_14(%arg0: i32, %arg1: i32) -> (i32, i32) {
    %c0_i32 = arith.constant 0 : i32
    %c0_i32_0 = arith.constant 0 : i32
    %c0_i32_1 = arith.constant 0 : i32
    return %c0_i32, %c0_i32_0 : i32, i32
  }
  func.func @transform_15(%arg0: i32, %arg1: i32) -> (i32, i32) {
    %c0_i32 = arith.constant 0 : i32
    %c0_i32_0 = arith.constant 0 : i32
    %c0_i32_1 = arith.constant 0 : i32
    return %c0_i32, %c0_i32_0 : i32, i32
  }
  func.func @transform_16(%arg0: i32, %arg1: i32) -> (i32, i32, i32) {
    %c0_i32 = arith.constant 0 : i32
    %c0_i32_0 = arith.constant 0 : i32
    return %arg1, %arg0, %c0_i32 : i32, i32, i32
  }
  func.func @transform_17(%arg0: i32, %arg1: i32) -> (i32, i32, i32) {
    %c0_i32 = arith.constant 0 : i32
    %c0_i32_0 = arith.constant 0 : i32
    %c0_i32_1 = arith.constant 0 : i32
    return %arg0, %c0_i32, %c0_i32_0 : i32, i32, i32
  }
  func.func @transform_18(%arg0: i32, %arg1: i32) -> (i32, i32, i32) {
    %c0_i32 = arith.constant 0 : i32
    %c0_i32_0 = arith.constant 0 : i32
    %c0_i32_1 = arith.constant 0 : i32
    return %arg0, %c0_i32, %c0_i32_0 : i32, i32, i32
  }
}

</mosaic_0001>

<llo_original>
// kernel: tpu_custom_call.1
$region0: #{tpu_custom_call.1}
  #allocation0 [shape = 'u32[]', space=smem, size = 0x4, offset = 0x4, fixed_abs, tag = 'smem constant byte address 0x4 - core index']
  #allocation1 [shape = 'u32[144,128]{1,0:T(1,128)}', space=vmem, size = 0x12000, scoped, tag = 'internal scratch']
  #allocation2 [shape = 'f32[2,16,128]{2,1,0:T(8,128)}', space=vmem, size = 0x4000, scoped, tag = 'scratch operand']
  #allocation3 [shape = 'f32[2,3,128]{2,1,0:T(4,128)}', space=vmem, size = 0x1000, scoped, tag = 'scratch operand']
  %s0 = inlined_call_operand.vmem [shape: f32[1,2,128], index: 0, kind: input, shape index: {}]
  %s1 = inlined_call_operand.vmem [shape: f32[2,16,128], index: 1, kind: input, shape index: {}, may-alias: {1,17}]
  %s2 = inlined_call_operand.vmem [shape: f32[2,3,128], index: 2, kind: input, shape index: {}, may-alias: {2,18}]
  %s3 = inlined_call_operand.vmem [shape: f32[128,128], index: 3, kind: input, shape index: {}]
  %s4 = inlined_call_operand.hbm [shape: f32[1,128], index: 4, kind: input, shape index: {}]
  %s5 = inlined_call_operand.vmem [shape: f32[128,256], index: 5, kind: input, shape index: {}]
  %s6 = inlined_call_operand.hbm [shape: f32[4,128], index: 6, kind: input, shape index: {}]
  %s7 = inlined_call_operand.hbm [shape: f32[1,128], index: 7, kind: input, shape index: {}]
  %s8 = inlined_call_operand.vmem [shape: f32[128,16], index: 8, kind: input, shape index: {}]
  %s9 = inlined_call_operand.vmem [shape: f32[128,16], index: 9, kind: input, shape index: {}]
  %s10 = inlined_call_operand.hbm [shape: f32[128,128], index: 10, kind: input, shape index: {}]
  %s11 = inlined_call_operand.hbm [shape: f32[128,128], index: 11, kind: input, shape index: {}]
  %s12 = inlined_call_operand.hbm [shape: f32[1,128], index: 12, kind: input, shape index: {}]
  %s13 = inlined_call_operand.hbm [shape: f32[16,128], index: 13, kind: input, shape index: {}]
  %s14 = inlined_call_operand.hbm [shape: f32[1,128], index: 14, kind: input, shape index: {}]
  %s15 = inlined_call_operand.hbm [shape: f32[128,128], index: 15, kind: input, shape index: {}]
  %s16 = inlined_call_operand.hbm [shape: f32[1,2,128], index: 16, kind: output, shape index: {0}]
  %s17 = inlined_call_operand.vmem [shape: f32[2,16,128], index: 17, kind: output, shape index: {1}, may-alias: {1,17}]
  %s18 = inlined_call_operand.vmem [shape: f32[2,3,128], index: 18, kind: output, shape index: {2}, may-alias: {2,18}]
  %19 = xla_tuple %s16, %s17, %s18
  %s20 = sld [smem:[#allocation0]]
  $region134: #{tpu_custom_call.1} parent=0
    _
  %s22 = ssub.s32 1, %s20
  %s23 = scalar_select 0, %s22, %s20
  $region1: #{tpu_custom_call.1} parent=0
    #allocation4 [shape = 'u8[512]{0}', space=vmem, size = 0x400, scoped, tag = 'input window, operand 4, single buffered']
    #allocation5 [shape = 's32[1]{0}', space=sflag, size = 0x4, scoped, tag = 'scoped memory for tpu_custom_call.1']
    #allocation6 [shape = 's32[1]{0}', space=sflag, size = 0x4, scoped, tag = 'scoped memory for tpu_custom_call.1']
    #allocation7 [shape = 'u8[2048]{0}', space=vmem, size = 0x800, scoped, tag = 'input window, operand 6, single buffered']
    #allocation8 [shape = 's32[1]{0}', space=sflag, size = 0x4, scoped, tag = 'scoped memory for tpu_custom_call.1']
    #allocation9 [shape = 'u8[512]{0}', space=vmem, size = 0x400, scoped, tag = 'input window, operand 7, single buffered']
    #allocation10 [shape = 'u8[65536]{0}', space=vmem, size = 0x10000, scoped, tag = 'input window, operand 10, single buffered']
    #allocation11 [shape = 's32[1]{0}', space=sflag, size = 0x4, scoped, tag = 'scoped memory for tpu_custom_call.1']
    #allocation12 [shape = 'u8[65536]{0}', space=vmem, size = 0x10000, scoped, tag = 'input window, operand 11, single buffered']
    #allocation13 [shape = 'u8[512]{0}', space=vmem, size = 0x400, scoped, tag = 'input window, operand 12, single buffered']
    #allocation14 [shape = 's32[1]{0}', space=sflag, size = 0x4, scoped, tag = 'scoped memory for tpu_custom_call.1']
    #allocation15 [shape = 'u8[8192]{0}', space=vmem, size = 0x2000, scoped, tag = 'input window, operand 13, single buffered']
    #allocation16 [shape = 'u8[512]{0}', space=vmem, size = 0x400, scoped, tag = 'input window, operand 14, single buffered']
    #allocation17 [shape = 's32[1]{0}', space=sflag, size = 0x4, scoped, tag = 'scoped memory for tpu_custom_call.1']
    #allocation18 [shape = 'u8[65536]{0}', space=vmem, size = 0x10000, scoped, tag = 'input window, operand 15, single buffered']
    #allocation19 [shape = 'u8[1024]{0}', space=vmem, size = 0x400, scoped, tag = 'output window, operand 0, single buffered']
    %24 = vsyncpa [#allocation5], 0
    %25 = vsyncpa [#allocation8], 0
    %26 = vsyncpa [#allocation11], 0
    %27 = vsyncpa [#allocation14], 0
    %28 = vsyncpa [#allocation17], 0
    %29 = vsyncpa [#allocation6], 0
    // Predicated region
    $region2: #{tpu_custom_call.1} parent=1 // pred_check
      _
    $region3: #{tpu_custom_call.1} parent=1 // pred_check_branch
      %31 = sbr.rel (0) target = $region5
    $region4: #{tpu_custom_call.1} parent=1 // pred_region
      _
    $region5: #{tpu_custom_call.1} parent=1 // pred_fallthru
      _
    // Predicated region
    $region6: #{tpu_custom_call.1} parent=1 // pred_check
      _
    $region7: #{tpu_custom_call.1} parent=1 // pred_check_branch
      %33 = sbr.rel (0) target = $region9
    $region8: #{tpu_custom_call.1} parent=1 // pred_region
      _
    $region9: #{tpu_custom_call.1} parent=1 // pred_fallthru
      _
    // Predicated region
    $region10: #{tpu_custom_call.1} parent=1 // pred_check
      _
    $region11: #{tpu_custom_call.1} parent=1 // pred_check_branch
      %35 = sbr.rel (0) target = $region13
    $region12: #{tpu_custom_call.1} parent=1 // pred_region
      _
    $region13: #{tpu_custom_call.1} parent=1 // pred_fallthru
      _
    // Predicated region
    $region14: #{tpu_custom_call.1} parent=1 // pred_check
      _
    $region15: #{tpu_custom_call.1} parent=1 // pred_check_branch
      %37 = sbr.rel (0) target = $region17
    $region16: #{tpu_custom_call.1} parent=1 // pred_region
      _
    $region17: #{tpu_custom_call.1} parent=1 // pred_fallthru
      _
    // Predicated region
    $region18: #{tpu_custom_call.1} parent=1 // pred_check
      _
    $region19: #{tpu_custom_call.1} parent=1 // pred_check_branch
      %39 = sbr.rel (0) target = $region21
    $region20: #{tpu_custom_call.1} parent=1 // pred_region
      %s41 = ssub.s32 16, 16
      %42 = vsyncadd [#allocation5], %s41
      %s44 = sshll.u32 [#allocation4], 4
      %s45 = int_to_ptr.vmem [resolvable:$true] %s44
      %47 = dma.hbm_to_vmem [thread:$0]  %s4, 16, %s45, [#allocation5]
    $region21: #{tpu_custom_call.1} parent=1 // pred_fallthru
      _
    // Predicated region
    $region22: #{tpu_custom_call.1} parent=1 // pred_check
      _
    $region23: #{tpu_custom_call.1} parent=1 // pred_check_branch
      %49 = sbr.rel (0) target = $region25
    $region24: #{tpu_custom_call.1} parent=1 // pred_region
      _
    $region25: #{tpu_custom_call.1} parent=1 // pred_fallthru
      _
    // Predicated region
    $region26: #{tpu_custom_call.1} parent=1 // pred_check
      _
    $region27: #{tpu_custom_call.1} parent=1 // pred_check_branch
      %51 = sbr.rel (0) target = $region29
    $region28: #{tpu_custom_call.1} parent=1 // pred_region
      %s53 = ssub.s32 64, 64
      %54 = vsyncadd [#allocation8], %s53
      %s56 = sshll.u32 [#allocation7], 4
      %s57 = int_to_ptr.vmem [resolvable:$true] %s56
      %59 = dma.hbm_to_vmem [thread:$0]  %s6, 64, %s57, [#allocation8]
    $region29: #{tpu_custom_call.1} parent=1 // pred_fallthru
      _
    // Predicated region
    $region30: #{tpu_custom_call.1} parent=1 // pred_check
      _
    $region31: #{tpu_custom_call.1} parent=1 // pred_check_branch
      %61 = sbr.rel (0) target = $region33
    $region32: #{tpu_custom_call.1} parent=1 // pred_region
      %s63 = ssub.s32 16, 16
      %64 = vsyncadd [#allocation8], %s63
      %s66 = sshll.u32 [#allocation9], 4
      %s67 = int_to_ptr.vmem [resolvable:$true] %s66
      %69 = dma.hbm_to_vmem [thread:$0]  %s7, 16, %s67, [#allocation8]
    $region33: #{tpu_custom_call.1} parent=1 // pred_fallthru
      _
    // Predicated region
    $region34: #{tpu_custom_call.1} parent=1 // pred_check
      _
    $region35: #{tpu_custom_call.1} parent=1 // pred_check_branch
      %71 = sbr.rel (0) target = $region37
    $region36: #{tpu_custom_call.1} parent=1 // pred_region
      _
    $region37: #{tpu_custom_call.1} parent=1 // pred_fallthru
      _
    // Predicated region
    $region38: #{tpu_custom_call.1} parent=1 // pred_check
      _
    $region39: #{tpu_custom_call.1} parent=1 // pred_check_branch
      %73 = sbr.rel (0) target = $region41
    $region40: #{tpu_custom_call.1} parent=1 // pred_region
      _
    $region41: #{tpu_custom_call.1} parent=1 // pred_fallthru
      _
    // Predicated region
    $region42: #{tpu_custom_call.1} parent=1 // pred_check
      _
    $region43: #{tpu_custom_call.1} parent=1 // pred_check_branch
      %75 = sbr.rel (0) target = $region45
    $region44: #{tpu_custom_call.1} parent=1 // pred_region
      %s77 = ssub.s32 2048, 2048
      %78 = vsyncadd [#allocation11], %s77
      %s79 = sshll.u32 [#allocation10], 4
      %s80 = int_to_ptr.vmem [resolvable:$true] %s79
      %85 = dma.hbm_to_vmem [thread:$0]  %s10, 2048, %s80, [#allocation11], 128, 128, 8
    $region45: #{tpu_custom_call.1} parent=1 // pred_fallthru
      _
    // Predicated region
    $region46: #{tpu_custom_call.1} parent=1 // pred_check
      _
    $region47: #{tpu_custom_call.1} parent=1 // pred_check_branch
      %87 = sbr.rel (0) target = $region49
    $region48: #{tpu_custom_call.1} parent=1 // pred_region
      %s89 = ssub.s32 2048, 2048
      %90 = vsyncadd [#allocation11], %s89
      %s91 = sshll.u32 [#allocation12], 4
      %s92 = int_to_ptr.vmem [resolvable:$true] %s91
      %97 = dma.hbm_to_vmem [thread:$0]  %s11, 2048, %s92, [#allocation11], 128, 128, 8
    $region49: #{tpu_custom_call.1} parent=1 // pred_fallthru
      _
    // Predicated region
    $region50: #{tpu_custom_call.1} parent=1 // pred_check
      _
    $region51: #{tpu_custom_call.1} parent=1 // pred_check_branch
      %99 = sbr.rel (0) target = $region53
    $region52: #{tpu_custom_call.1} parent=1 // pred_region
      %s101 = ssub.s32 16, 16
      %102 = vsyncadd [#allocation14], %s101
      %s104 = sshll.u32 [#allocation13], 4
      %s105 = int_to_ptr.vmem [resolvable:$true] %s104
      %107 = dma.hbm_to_vmem [thread:$0]  %s12, 16, %s105, [#allocation14]
    $region53: #{tpu_custom_call.1} parent=1 // pred_fallthru
      _
    // Predicated region
    $region54: #{tpu_custom_call.1} parent=1 // pred_check
      _
    $region55: #{tpu_custom_call.1} parent=1 // pred_check_branch
      %109 = sbr.rel (0) target = $region57
    $region56: #{tpu_custom_call.1} parent=1 // pred_region
      %s111 = ssub.s32 256, 256
      %112 = vsyncadd [#allocation14], %s111
      %s113 = sshll.u32 [#allocation15], 4
      %s114 = int_to_ptr.vmem [resolvable:$true] %s113
      %119 = dma.hbm_to_vmem [thread:$0]  %s13, 256, %s114, [#allocation14], 128, 128, 8
    $region57: #{tpu_custom_call.1} parent=1 // pred_fallthru
      _
    // Predicated region
    $region58: #{tpu_custom_call.1} parent=1 // pred_check
      _
    $region59: #{tpu_custom_call.1} parent=1 // pred_check_branch
      %121 = sbr.rel (0) target = $region61
    $region60: #{tpu_custom_call.1} parent=1 // pred_region
      %s123 = ssub.s32 16, 16
      %124 = vsyncadd [#allocation17], %s123
      %s126 = sshll.u32 [#allocation16], 4
      %s127 = int_to_ptr.vmem [resolvable:$true] %s126
      %129 = dma.hbm_to_vmem [thread:$0]  %s14, 16, %s127, [#allocation17]
    $region61: #{tpu_custom_call.1} parent=1 // pred_fallthru
      _
    // Predicated region
    $region62: #{tpu_custom_call.1} parent=1 // pred_check
      _
    $region63: #{tpu_custom_call.1} parent=1 // pred_check_branch
      %131 = sbr.rel (0) target = $region65
    $region64: #{tpu_custom_call.1} parent=1 // pred_region
      %s133 = ssub.s32 2048, 2048
      %134 = vsyncadd [#allocation17], %s133
      %s135 = sshll.u32 [#allocation18], 4
      %s136 = int_to_ptr.vmem [resolvable:$true] %s135
      %141 = dma.hbm_to_vmem [thread:$0]  %s15, 2048, %s136, [#allocation17], 128, 128, 8
    $region65: #{tpu_custom_call.1} parent=1 // pred_fallthru
      _
    // Predicated region
    $region66: #{tpu_custom_call.1} parent=1 // pred_check
      _
    $region67: #{tpu_custom_call.1} parent=1 // pred_check_branch
      %143 = sbr.rel (0) target = $region69
    $region68: #{tpu_custom_call.1} parent=1 // pred_region
      %144 = dma.done [#allocation5], 16
    $region69: #{tpu_custom_call.1} parent=1 // pred_fallthru
      _
    // Predicated region
    $region70: #{tpu_custom_call.1} parent=1 // pred_check
      _
    $region71: #{tpu_custom_call.1} parent=1 // pred_check_branch
      %146 = sbr.rel (0) target = $region73
    $region72: #{tpu_custom_call.1} parent=1 // pred_region
      %147 = dma.done [#allocation8], 64
    $region73: #{tpu_custom_call.1} parent=1 // pred_fallthru
      _
    // Predicated region
    $region74: #{tpu_custom_call.1} parent=1 // pred_check
      _
    $region75: #{tpu_custom_call.1} parent=1 // pred_check_branch
      %149 = sbr.rel (0) target = $region77
    $region76: #{tpu_custom_call.1} parent=1 // pred_region
      %150 = dma.done [#allocation8], 16
    $region77: #{tpu_custom_call.1} parent=1 // pred_fallthru
      _
    // Predicated region
    $region78: #{tpu_custom_call.1} parent=1 // pred_check
      _
    $region79: #{tpu_custom_call.1} parent=1 // pred_check_branch
      %152 = sbr.rel (0) target = $region81
    $region80: #{tpu_custom_call.1} parent=1 // pred_region
      %153 = dma.done [#allocation11], 2048
    $region81: #{tpu_custom_call.1} parent=1 // pred_fallthru
      _
    // Predicated region
    $region82: #{tpu_custom_call.1} parent=1 // pred_check
      _
    $region83: #{tpu_custom_call.1} parent=1 // pred_check_branch
      %155 = sbr.rel (0) target = $region85
    $region84: #{tpu_custom_call.1} parent=1 // pred_region
      %156 = dma.done [#allocation11], 2048
    $region85: #{tpu_custom_call.1} parent=1 // pred_fallthru
      _
    // Predicated region
    $region86: #{tpu_custom_call.1} parent=1 // pred_check
      _
    $region87: #{tpu_custom_call.1} parent=1 // pred_check_branch
      %158 = sbr.rel (0) target = $region89
    $region88: #{tpu_custom_call.1} parent=1 // pred_region
      %159 = dma.done [#allocation14], 16
    $region89: #{tpu_custom_call.1} parent=1 // pred_fallthru
      _
    // Predicated region
    $region90: #{tpu_custom_call.1} parent=1 // pred_check
      _
    $region91: #{tpu_custom_call.1} parent=1 // pred_check_branch
      %161 = sbr.rel (0) target = $region93
    $region92: #{tpu_custom_call.1} parent=1 // pred_region
      %162 = dma.done [#allocation14], 256
    $region93: #{tpu_custom_call.1} parent=1 // pred_fallthru
      _
    // Predicated region
    $region94: #{tpu_custom_call.1} parent=1 // pred_check
      _
    $region95: #{tpu_custom_call.1} parent=1 // pred_check_branch
      %164 = sbr.rel (0) target = $region97
    $region96: #{tpu_custom_call.1} parent=1 // pred_region
      %165 = dma.done [#allocation17], 16
    $region97: #{tpu_custom_call.1} parent=1 // pred_fallthru
      _
    // Predicated region
    $region98: #{tpu_custom_call.1} parent=1 // pred_check
      _
    $region99: #{tpu_custom_call.1} parent=1 // pred_check_branch
      %167 = sbr.rel (0) target = $region101
    $region100: #{tpu_custom_call.1} parent=1 // pred_region
      %168 = dma.done [#allocation17], 2048
    $region101: #{tpu_custom_call.1} parent=1 // pred_fallthru
      _
    %p169 = scmp.eq.s32.totalorder 0, 0
    // Predicated region
    $region102: #{tpu_custom_call.1} parent=1 // pred_check
      %p170 = pneg %p169
    $region103: #{tpu_custom_call.1} parent=1 // pred_check_branch
      %172 = sbr.rel (%p170) target = $region105
    $region104: #{tpu_custom_call.1} parent=1 // pred_region
      %v173 = vld [vmem:[%s1] sm:$0xff]
      %v174 = vld [vmem:[%s1 + $0x8] sm:$0xff]
      %v175 = vld [vmem:[%s1 + $0x10] sm:$0xff]
      %v176 = vld [vmem:[%s1 + $0x18] sm:$0xff]
      %177 = vst [vmem:[#allocation2] sm:$0xff] %v173
      %178 = vst [vmem:[#allocation2 + $0x8] sm:$0xff] %v174
      %179 = vst [vmem:[#allocation2 + $0x10] sm:$0xff] %v175
      %180 = vst [vmem:[#allocation2 + $0x18] sm:$0xff] %v176
      %v181 = vld [vmem:[%s2] sm:$0x7]
      %v182 = vld [vmem:[%s2 + $0x4] sm:$0x7]
      %183 = vst [vmem:[#allocation3] sm:$0x7] %v181
      %184 = vst [vmem:[#allocation3 + $0x4] sm:$0x7] %v182
    $region105: #{tpu_custom_call.1} parent=1 // pred_fallthru
      _
    %v185 = vld [vmem:[%s0] sm:$0x3]
    %v186 = vld [vmem:[#allocation2] sm:$0xff]
    %v187 = vld [vmem:[#allocation2 + $0x8] sm:$0xff]
    %v188 = vld [vmem:[#allocation2 + $0x10] sm:$0xff]
    %v189 = vld [vmem:[#allocation2 + $0x18] sm:$0xff]
    %v190 = vld [vmem:[#allocation3] sm:$0x7]
    %v191 = vld [vmem:[#allocation3 + $0x4] sm:$0x7]
    %v192 = vld [vmem:[%s3] sm:$0xff]
    %v193 = vld [vmem:[%s3 + $0x8] sm:$0xff]
    %v194 = vld [vmem:[%s3 + $0x10] sm:$0xff]
    %v195 = vld [vmem:[%s3 + $0x18] sm:$0xff]
    %v196 = vld [vmem:[%s3 + $0x20] sm:$0xff]
    %v197 = vld [vmem:[%s3 + $0x28] sm:$0xff]
    %v198 = vld [vmem:[%s3 + $0x30] sm:$0xff]
    %v199 = vld [vmem:[%s3 + $0x38] sm:$0xff]
    %v200 = vld [vmem:[%s3 + $0x40] sm:$0xff]
    %v201 = vld [vmem:[%s3 + $0x48] sm:$0xff]
    %v202 = vld [vmem:[%s3 + $0x50] sm:$0xff]
    %v203 = vld [vmem:[%s3 + $0x58] sm:$0xff]
    %v204 = vld [vmem:[%s3 + $0x60] sm:$0xff]
    %v205 = vld [vmem:[%s3 + $0x68] sm:$0xff]
    %v206 = vld [vmem:[%s3 + $0x70] sm:$0xff]
    %v207 = vld [vmem:[%s3 + $0x78] sm:$0xff]
    %208 = vmatprep.subr.mxu0 0.0
    %209 = vmatpush1.msra.mxu0 %v192
    %210 = vmatprep.subr.mxu0 0.0
    %211 = vmatpush1.msra.mxu0 %v193
    %212 = vmatprep.subr.mxu0 0.0
    %213 = vmatpush1.msra.mxu0 %v194
    %214 = vmatprep.subr.mxu0 0.0
    %215 = vmatpush1.msra.mxu0 %v195
    %216 = vmatprep.subr.mxu0 0.0
    %217 = vmatpush1.msra.mxu0 %v196
    %218 = vmatprep.subr.mxu0 0.0
    %219 = vmatpush1.msra.mxu0 %v197
    %220 = vmatprep.subr.mxu0 0.0
    %221 = vmatpush1.msra.mxu0 %v198
    %222 = vmatprep.subr.mxu0 0.0
    %223 = vmatpush1.msra.mxu0 %v199
    %224 = vmatprep.subr.mxu0 0.0
    %225 = vmatpush1.msra.mxu0 %v200
    %226 = vmatprep.subr.mxu0 0.0
    %227 = vmatpush1.msra.mxu0 %v201
    %228 = vmatprep.subr.mxu0 0.0
    %229 = vmatpush1.msra.mxu0 %v202
    %230 = vmatprep.subr.mxu0 0.0
    %231 = vmatpush1.msra.mxu0 %v203
    %232 = vmatprep.subr.mxu0 0.0
    %233 = vmatpush1.msra.mxu0 %v204
    %234 = vmatprep.subr.mxu0 0.0
    %235 = vmatpush1.msra.mxu0 %v205
    %236 = vmatprep.subr.mxu0 0.0
    %237 = vmatpush1.msra.mxu0 %v206
    %238 = vmatprep.subr.mxu0 0.0
    %239 = vmatpush1.msra.mxu0 %v207
    %240 = vmatprep.subr.mxu0 0.0
    %241 = vmatpush1.msra.mxu0 0.0
    %242 = vmatprep.subr.mxu0 0.0
    %243 = vmatpush1.msra.mxu0 0.0
    %244 = vmatprep.subr.mxu0 0.0
    %245 = vmatpush1.msra.mxu0 0.0
    %246 = vmatprep.subr.mxu0 0.0
    %247 = vmatpush1.msra.mxu0 0.0
    %248 = vmatprep.subr.mxu0 0.0
    %249 = vmatpush1.msra.mxu0 0.0
    %250 = vmatprep.subr.mxu0 0.0
    %251 = vmatpush1.msra.mxu0 0.0
    %252 = vmatprep.subr.mxu0 0.0
    %253 = vmatpush1.msra.mxu0 0.0
    %254 = vmatprep.subr.mxu0 0.0
    %255 = vmatpush1.msra.mxu0 0.0
    %256 = vmatprep.subr.mxu0 0.0
    %257 = vmatpush1.msra.mxu0 0.0
    %258 = vmatprep.subr.mxu0 0.0
    %259 = vmatpush1.msra.mxu0 0.0
    %260 = vmatprep.subr.mxu0 0.0
    %261 = vmatpush1.msra.mxu0 0.0
    %262 = vmatprep.subr.mxu0 0.0
    %263 = vmatpush1.msra.mxu0 0.0
    %264 = vmatprep.subr.mxu0 0.0
    %265 = vmatpush1.msra.mxu0 0.0
    %266 = vmatprep.subr.mxu0 0.0
    %267 = vmatpush1.msra.mxu0 0.0
    %268 = vmatprep.subr.mxu0 0.0
    %269 = vmatpush1.msra.mxu0 0.0
    %270 = vmatprep.subr.mxu0 0.0
    %271 = vmatpush1.msra.mxu0 0.0
    %272 = vmatprep.mubr.f32.mxu0 0.0
    %273 = vmatmul.mubr.f32.gmra.mrb[0].mxu0 %v185
    %v274 = vpop.f32.mrb[0].mxu0
    %v275 = vadd.f32 0.0, %v274
    %v276 = vpop.f32.mrb[0].mxu0
    %277 = vdwg.mxu0
    %v278 = vmul.f32 %v275, %v275
    %vm279 = vcmask 1041408
    %v280 = vsel %vm279, %v278, 0.0
    %281 = vadd.xlane.f32.xlu0 %v280
    %v282 = vpop.xlane.xlu0 %281
    %v283 = vmul.f32 %v282, 0.03125
    %v284 = vadd.f32 %v283, 1e-05
    %v285 = vrsqrt.pop %v284
    %v286 = vmul.f32 %v275, %v285
    %v287 = vld [vmem:[#allocation4] sm:$0x1]
    %v289 = vlaneseq
    %v290 = vshrl.u32 %v289, 7
    %v291 = vsub.s32 0, %v290
    %v292 = vrot.slane %v287, %v291
    %v294 = vmul.f32 %v286, %v292
    %v295 = vld [vmem:[%s5] sm:$0xff]
    %v296 = vld [vmem:[%s5 + $0x8] sm:$0xff]
    %v297 = vld [vmem:[%s5 + $0x10] sm:$0xff]
    %v298 = vld [vmem:[%s5 + $0x18] sm:$0xff]
    %v299 = vld [vmem:[%s5 + $0x20] sm:$0xff]
    %v300 = vld [vmem:[%s5 + $0x28] sm:$0xff]
    %v301 = vld [vmem:[%s5 + $0x30] sm:$0xff]
    %v302 = vld [vmem:[%s5 + $0x38] sm:$0xff]
    %v303 = vld [vmem:[%s5 + $0x40] sm:$0xff]
    %v304 = vld [vmem:[%s5 + $0x48] sm:$0xff]
    %v305 = vld [vmem:[%s5 + $0x50] sm:$0xff]
    %v306 = vld [vmem:[%s5 + $0x58] sm:$0xff]
    %v307 = vld [vmem:[%s5 + $0x60] sm:$0xff]
    %v308 = vld [vmem:[%s5 + $0x68] sm:$0xff]
    %v309 = vld [vmem:[%s5 + $0x70] sm:$0xff]
    %v310 = vld [vmem:[%s5 + $0x78] sm:$0xff]
    %v311 = vld [vmem:[%s5 + $0x80] sm:$0xff]
    %v312 = vld [vmem:[%s5 + $0x88] sm:$0xff]
    %v313 = vld [vmem:[%s5 + $0x90] sm:$0xff]
    %v314 = vld [vmem:[%s5 + $0x98] sm:$0xff]
    %v315 = vld [vmem:[%s5 + $0xa0] sm:$0xff]
    %v316 = vld [vmem:[%s5 + $0xa8] sm:$0xff]
    %v317 = vld [vmem:[%s5 + $0xb0] sm:$0xff]
    %v318 = vld [vmem:[%s5 + $0xb8] sm:$0xff]
    %v319 = vld [vmem:[%s5 + $0xc0] sm:$0xff]
    %v320 = vld [vmem:[%s5 + $0xc8] sm:$0xff]
    %v321 = vld [vmem:[%s5 + $0xd0] sm:$0xff]
    %v322 = vld [vmem:[%s5 + $0xd8] sm:$0xff]
    %v323 = vld [vmem:[%s5 + $0xe0] sm:$0xff]
    %v324 = vld [vmem:[%s5 + $0xe8] sm:$0xff]
    %v325 = vld [vmem:[%s5 + $0xf0] sm:$0xff]
    %v326 = vld [vmem:[%s5 + $0xf8] sm:$0xff]
    %327 = vmatprep.subr.mxu0 %v296
    %328 = vmatpush1.msra.mxu0 %v295
    %329 = vmatprep.subr.mxu0 %v298
    %330 = vmatpush1.msra.mxu0 %v297
    %331 = vmatprep.subr.mxu0 %v300
    %332 = vmatpush1.msra.mxu0 %v299
    %333 = vmatprep.subr.mxu0 %v302
    %334 = vmatpush1.msra.mxu0 %v301
    %335 = vmatprep.subr.mxu0 %v304
    %336 = vmatpush1.msra.mxu0 %v303
    %337 = vmatprep.subr.mxu0 %v306
    %338 = vmatpush1.msra.mxu0 %v305
    %339 = vmatprep.subr.mxu0 %v308
    %340 = vmatpush1.msra.mxu0 %v307
    %341 = vmatprep.subr.mxu0 %v310
    %342 = vmatpush1.msra.mxu0 %v309
    %343 = vmatprep.subr.mxu0 %v312
    %344 = vmatpush1.msra.mxu0 %v311
    %345 = vmatprep.subr.mxu0 %v314
    %346 = vmatpush1.msra.mxu0 %v313
    %347 = vmatprep.subr.mxu0 %v316
    %348 = vmatpush1.msra.mxu0 %v315
    %349 = vmatprep.subr.mxu0 %v318
    %350 = vmatpush1.msra.mxu0 %v317
    %351 = vmatprep.subr.mxu0 %v320
    %352 = vmatpush1.msra.mxu0 %v319
    %353 = vmatprep.subr.mxu0 %v322
    %354 = vmatpush1.msra.mxu0 %v321
    %355 = vmatprep.subr.mxu0 %v324
    %356 = vmatpush1.msra.mxu0 %v323
    %357 = vmatprep.subr.mxu0 %v326
    %358 = vmatpush1.msra.mxu0 %v325
    %359 = vmatprep.subr.mxu0 0.0
    %360 = vmatpush1.msra.mxu0 0.0
    %361 = vmatprep.subr.mxu0 0.0
    %362 = vmatpush1.msra.mxu0 0.0
    %363 = vmatprep.subr.mxu0 0.0
    %364 = vmatpush1.msra.mxu0 0.0
    %365 = vmatprep.subr.mxu0 0.0
    %366 = vmatpush1.msra.mxu0 0.0
    %367 = vmatprep.subr.mxu0 0.0
    %368 = vmatpush1.msra.mxu0 0.0
    %369 = vmatprep.subr.mxu0 0.0
    %370 = vmatpush1.msra.mxu0 0.0
    %371 = vmatprep.subr.mxu0 0.0
    %372 = vmatpush1.msra.mxu0 0.0
    %373 = vmatprep.subr.mxu0 0.0
    %374 = vmatpush1.msra.mxu0 0.0
    %375 = vmatprep.subr.mxu0 0.0
    %376 = vmatpush1.msra.mxu0 0.0
    %377 = vmatprep.subr.mxu0 0.0
    %378 = vmatpush1.msra.mxu0 0.0
    %379 = vmatprep.subr.mxu0 0.0
    %380 = vmatpush1.msra.mxu0 0.0
    %381 = vmatprep.subr.mxu0 0.0
    %382 = vmatpush1.msra.mxu0 0.0
    %383 = vmatprep.subr.mxu0 0.0
    %384 = vmatpush1.msra.mxu0 0.0
    %385 = vmatprep.subr.mxu0 0.0
    %386 = vmatpush1.msra.mxu0 0.0
    %387 = vmatprep.subr.mxu0 0.0
    %388 = vmatpush1.msra.mxu0 0.0
    %389 = vmatprep.subr.mxu0 0.0
    %390 = vmatpush1.msra.mxu0 0.0
    %391 = vmatprep.mubr.f32.mxu0 0.0
    %392 = vmatmul.mubr.f32.gmra.mrb[0].mxu0 %v294
    %v393 = vpop.f32.mrb[0].mxu0
    %v394 = vadd.f32 0.0, %v393
    %v395 = vpop.f32.mrb[0].mxu0
    %v396 = vadd.f32 0.0, %v395
    %397 = vdwg.mxu0
    %v398 = vld [vmem:[#allocation7] sm:$0xf]
    %v399 = vlaneseq
    %v400 = vshrl.u32 %v399, 7
    %v401 = vsub.s32 3, %v400
    %v402 = vrot.slane %v398, %v401
    %v403 = vmul.f32 %v394, %v402
    %v404 = vld [vmem:[#allocation9] sm:$0x1]
    %v406 = vlaneseq
    %v407 = vshrl.u32 %v406, 7
    %v408 = vsub.s32 0, %v407
    %v409 = vrot.slane %v404, %v408
    %v411 = vadd.f32 %v403, %v409
    %v412 = vlaneseq
    %v413 = vshrl.u32 %v412, 7
    %v414 = vsub.s32 0, %v413
    %v415 = vrot.slane %v398, %v414
    %v416 = vmul.f32 %v190, %v415
    %v417 = vmul.f32 %v191, %v415
    %v420 = vrot.slane %v417, 7
    %vm421 = vcmask 1041409
    %v422 = vsel %vm421, %v420, %v416
    %v424 = vadd.f32 %v411, %v422
    %v425 = vlaneseq
    %v426 = vshrl.u32 %v425, 7
    %v427 = vsub.s32 1, %v426
    %v428 = vrot.slane %v398, %v427
    %v429 = vmul.f32 %v190, %v428
    %v430 = vmul.f32 %v191, %v428
    %v433 = vrot.slane %v429, 1
    %v434 = vsel %vm421, %v430, %v433
    %v436 = vadd.f32 %v424, %v434
    %v437 = vlaneseq
    %v438 = vshrl.u32 %v437, 7
    %v439 = vsub.s32 2, %v438
    %v440 = vrot.slane %v398, %v439
    %v441 = vmul.f32 %v190, %v440
    %v442 = vmul.f32 %v191, %v440
    %v445 = vrot.slane %v441, 2
    %v446 = vrot.slane %v442, 1
    %v447 = vsel %vm421, %v446, %v445
    %v449 = vadd.f32 %v436, %v447
    %v450 = vsub.f32 0.0, %v449
    %v451 = vmul.f32 %v450, 1.442695
    %v452 = vpow.pop %v451
    %v453 = vadd.f32 %v452, 1.0
    %v454 = vrcp.pop %v453
    %v455 = vmul.f32 %v449, %v454
    %v456 = vld [vmem:[%s8] sm:$0xff]
    %v457 = vld [vmem:[%s8 + $0x8] sm:$0xff]
    %v458 = vld [vmem:[%s8 + $0x10] sm:$0xff]
    %v459 = vld [vmem:[%s8 + $0x18] sm:$0xff]
    %v460 = vld [vmem:[%s8 + $0x20] sm:$0xff]
    %v461 = vld [vmem:[%s8 + $0x28] sm:$0xff]
    %v462 = vld [vmem:[%s8 + $0x30] sm:$0xff]
    %v463 = vld [vmem:[%s8 + $0x38] sm:$0xff]
    %v464 = vld [vmem:[%s8 + $0x40] sm:$0xff]
    %v465 = vld [vmem:[%s8 + $0x48] sm:$0xff]
    %v466 = vld [vmem:[%s8 + $0x50] sm:$0xff]
    %v467 = vld [vmem:[%s8 + $0x58] sm:$0xff]
    %v468 = vld [vmem:[%s8 + $0x60] sm:$0xff]
    %v469 = vld [vmem:[%s8 + $0x68] sm:$0xff]
    %v470 = vld [vmem:[%s8 + $0x70] sm:$0xff]
    %v471 = vld [vmem:[%s8 + $0x78] sm:$0xff]
    %472 = vmatprep.subr.mxu0 0.0
    %473 = vmatpush1.msra.mxu0 %v456
    %474 = vmatprep.subr.mxu0 0.0
    %475 = vmatpush1.msra.mxu0 %v457
    %476 = vmatprep.subr.mxu0 0.0
    %477 = vmatpush1.msra.mxu0 %v458
    %478 = vmatprep.subr.mxu0 0.0
    %479 = vmatpush1.msra.mxu0 %v459
    %480 = vmatprep.subr.mxu0 0.0
    %481 = vmatpush1.msra.mxu0 %v460
    %482 = vmatprep.subr.mxu0 0.0
    %483 = vmatpush1.msra.mxu0 %v461
    %484 = vmatprep.subr.mxu0 0.0
    %485 = vmatpush1.msra.mxu0 %v462
    %486 = vmatprep.subr.mxu0 0.0
    %487 = vmatpush1.msra.mxu0 %v463
    %488 = vmatprep.subr.mxu0 0.0
    %489 = vmatpush1.msra.mxu0 %v464
    %490 = vmatprep.subr.mxu0 0.0
    %491 = vmatpush1.msra.mxu0 %v465
    %492 = vmatprep.subr.mxu0 0.0
    %493 = vmatpush1.msra.mxu0 %v466
    %494 = vmatprep.subr.mxu0 0.0
    %495 = vmatpush1.msra.mxu0 %v467
    %496 = vmatprep.subr.mxu0 0.0
    %497 = vmatpush1.msra.mxu0 %v468
    %498 = vmatprep.subr.mxu0 0.0
    %499 = vmatpush1.msra.mxu0 %v469
    %500 = vmatprep.subr.mxu0 0.0
    %501 = vmatpush1.msra.mxu0 %v470
    %502 = vmatprep.subr.mxu0 0.0
    %503 = vmatpush1.msra.mxu0 %v471
    %504 = vmatprep.subr.mxu0 0.0
    %505 = vmatpush1.msra.mxu0 0.0
    %506 = vmatprep.subr.mxu0 0.0
    %507 = vmatpush1.msra.mxu0 0.0
    %508 = vmatprep.subr.mxu0 0.0
    %509 = vmatpush1.msra.mxu0 0.0
    %510 = vmatprep.subr.mxu0 0.0
    %511 = vmatpush1.msra.mxu0 0.0
    %512 = vmatprep.subr.mxu0 0.0
    %513 = vmatpush1.msra.mxu0 0.0
    %514 = vmatprep.subr.mxu0 0.0
    %515 = vmatpush1.msra.mxu0 0.0
    %516 = vmatprep.subr.mxu0 0.0
    %517 = vmatpush1.msra.mxu0 0.0
    %518 = vmatprep.subr.mxu0 0.0
    %519 = vmatpush1.msra.mxu0 0.0
    %520 = vmatprep.subr.mxu0 0.0
    %521 = vmatpush1.msra.mxu0 0.0
    %522 = vmatprep.subr.mxu0 0.0
    %523 = vmatpush1.msra.mxu0 0.0
    %524 = vmatprep.subr.mxu0 0.0
    %525 = vmatpush1.msra.mxu0 0.0
    %526 = vmatprep.subr.mxu0 0.0
    %527 = vmatpush1.msra.mxu0 0.0
    %528 = vmatprep.subr.mxu0 0.0
    %529 = vmatpush1.msra.mxu0 0.0
    %530 = vmatprep.subr.mxu0 0.0
    %531 = vmatpush1.msra.mxu0 0.0
    %532 = vmatprep.subr.mxu0 0.0
    %533 = vmatpush1.msra.mxu0 0.0
    %534 = vmatprep.subr.mxu0 0.0
    %535 = vmatpush1.msra.mxu0 0.0
    %536 = vmatprep.mubr.f32.mxu0 0.0
    %537 = vmatmul.mubr.f32.gmra.mrb[0].mxu0 %v455
    %v538 = vpop.f32.mrb[0].mxu0
    %v539 = vadd.f32 0.0, %v538
    %v540 = vpop.f32.mrb[0].mxu0
    %541 = vdwg.mxu0
    %v542 = vld [vmem:[%s9] sm:$0xff]
    %v543 = vld [vmem:[%s9 + $0x8] sm:$0xff]
    %v544 = vld [vmem:[%s9 + $0x10] sm:$0xff]
    %v545 = vld [vmem:[%s9 + $0x18] sm:$0xff]
    %v546 = vld [vmem:[%s9 + $0x20] sm:$0xff]
    %v547 = vld [vmem:[%s9 + $0x28] sm:$0xff]
    %v548 = vld [vmem:[%s9 + $0x30] sm:$0xff]
    %v549 = vld [vmem:[%s9 + $0x38] sm:$0xff]
    %v550 = vld [vmem:[%s9 + $0x40] sm:$0xff]
    %v551 = vld [vmem:[%s9 + $0x48] sm:$0xff]
    %v552 = vld [vmem:[%s9 + $0x50] sm:$0xff]
    %v553 = vld [vmem:[%s9 + $0x58] sm:$0xff]
    %v554 = vld [vmem:[%s9 + $0x60] sm:$0xff]
    %v555 = vld [vmem:[%s9 + $0x68] sm:$0xff]
    %v556 = vld [vmem:[%s9 + $0x70] sm:$0xff]
    %v557 = vld [vmem:[%s9 + $0x78] sm:$0xff]
    %558 = vmatprep.subr.mxu0 0.0
    %559 = vmatpush1.msra.mxu0 %v542
    %560 = vmatprep.subr.mxu0 0.0
    %561 = vmatpush1.msra.mxu0 %v543
    %562 = vmatprep.subr.mxu0 0.0
    %563 = vmatpush1.msra.mxu0 %v544
    %564 = vmatprep.subr.mxu0 0.0
    %565 = vmatpush1.msra.mxu0 %v545
    %566 = vmatprep.subr.mxu0 0.0
    %567 = vmatpush1.msra.mxu0 %v546
    %568 = vmatprep.subr.mxu0 0.0
    %569 = vmatpush1.msra.mxu0 %v547
    %570 = vmatprep.subr.mxu0 0.0
    %571 = vmatpush1.msra.mxu0 %v548
    %572 = vmatprep.subr.mxu0 0.0
    %573 = vmatpush1.msra.mxu0 %v549
    %574 = vmatprep.subr.mxu0 0.0
    %575 = vmatpush1.msra.mxu0 %v550
    %576 = vmatprep.subr.mxu0 0.0
    %577 = vmatpush1.msra.mxu0 %v551
    %578 = vmatprep.subr.mxu0 0.0
    %579 = vmatpush1.msra.mxu0 %v552
    %580 = vmatprep.subr.mxu0 0.0
    %581 = vmatpush1.msra.mxu0 %v553
    %582 = vmatprep.subr.mxu0 0.0
    %583 = vmatpush1.msra.mxu0 %v554
    %584 = vmatprep.subr.mxu0 0.0
    %585 = vmatpush1.msra.mxu0 %v555
    %586 = vmatprep.subr.mxu0 0.0
    %587 = vmatpush1.msra.mxu0 %v556
    %588 = vmatprep.subr.mxu0 0.0
    %589 = vmatpush1.msra.mxu0 %v557
    %590 = vmatprep.subr.mxu0 0.0
    %591 = vmatpush1.msra.mxu0 0.0
    %592 = vmatprep.subr.mxu0 0.0
    %593 = vmatpush1.msra.mxu0 0.0
    %594 = vmatprep.subr.mxu0 0.0
    %595 = vmatpush1.msra.mxu0 0.0
    %596 = vmatprep.subr.mxu0 0.0
    %597 = vmatpush1.msra.mxu0 0.0
    %598 = vmatprep.subr.mxu0 0.0
    %599 = vmatpush1.msra.mxu0 0.0
    %600 = vmatprep.subr.mxu0 0.0
    %601 = vmatpush1.msra.mxu0 0.0
    %602 = vmatprep.subr.mxu0 0.0
    %603 = vmatpush1.msra.mxu0 0.0
    %604 = vmatprep.subr.mxu0 0.0
    %605 = vmatpush1.msra.mxu0 0.0
    %606 = vmatprep.subr.mxu0 0.0
    %607 = vmatpush1.msra.mxu0 0.0
    %608 = vmatprep.subr.mxu0 0.0
    %609 = vmatpush1.msra.mxu0 0.0
    %610 = vmatprep.subr.mxu0 0.0
    %611 = vmatpush1.msra.mxu0 0.0
    %612 = vmatprep.subr.mxu0 0.0
    %613 = vmatpush1.msra.mxu0 0.0
    %614 = vmatprep.subr.mxu0 0.0
    %615 = vmatpush1.msra.mxu0 0.0
    %616 = vmatprep.subr.mxu0 0.0
    %617 = vmatpush1.msra.mxu0 0.0
    %618 = vmatprep.subr.mxu0 0.0
    %619 = vmatpush1.msra.mxu0 0.0
    %620 = vmatprep.subr.mxu0 0.0
    %621 = vmatpush1.msra.mxu0 0.0
    %622 = vmatprep.mubr.f32.mxu0 0.0
    %623 = vmatmul.mubr.f32.gmra.mrb[0].mxu0 %v455
    %v624 = vpop.f32.mrb[0].mxu0
    %v625 = vadd.f32 0.0, %v624
    %v626 = vpop.f32.mrb[0].mxu0
    %627 = vdwg.mxu0
    %v628 = vld [vmem:[#allocation10] sm:$0xff]
    %v629 = vld [vmem:[#allocation10 + $0x8] sm:$0xff]
    %v630 = vld [vmem:[#allocation10 + $0x10] sm:$0xff]
    %v631 = vld [vmem:[#allocation10 + $0x18] sm:$0xff]
    %v632 = vld [vmem:[#allocation10 + $0x20] sm:$0xff]
    %v633 = vld [vmem:[#allocation10 + $0x28] sm:$0xff]
    %v634 = vld [vmem:[#allocation10 + $0x30] sm:$0xff]
    %v635 = vld [vmem:[#allocation10 + $0x38] sm:$0xff]
    %v636 = vld [vmem:[#allocation10 + $0x40] sm:$0xff]
    %v637 = vld [vmem:[#allocation10 + $0x48] sm:$0xff]
    %v638 = vld [vmem:[#allocation10 + $0x50] sm:$0xff]
    %v639 = vld [vmem:[#allocation10 + $0x58] sm:$0xff]
    %v640 = vld [vmem:[#allocation10 + $0x60] sm:$0xff]
    %v641 = vld [vmem:[#allocation10 + $0x68] sm:$0xff]
    %v642 = vld [vmem:[#allocation10 + $0x70] sm:$0xff]
    %v643 = vld [vmem:[#allocation10 + $0x78] sm:$0xff]
    %644 = vmatprep.subr.mxu0 0.0
    %645 = vmatpush1.msra.mxu0 %v628
    %646 = vmatprep.subr.mxu0 0.0
    %647 = vmatpush1.msra.mxu0 %v629
    %648 = vmatprep.subr.mxu0 0.0
    %649 = vmatpush1.msra.mxu0 %v630
    %650 = vmatprep.subr.mxu0 0.0
    %651 = vmatpush1.msra.mxu0 %v631
    %652 = vmatprep.subr.mxu0 0.0
    %653 = vmatpush1.msra.mxu0 %v632
    %654 = vmatprep.subr.mxu0 0.0
    %655 = vmatpush1.msra.mxu0 %v633
    %656 = vmatprep.subr.mxu0 0.0
    %657 = vmatpush1.msra.mxu0 %v634
    %658 = vmatprep.subr.mxu0 0.0
    %659 = vmatpush1.msra.mxu0 %v635
    %660 = vmatprep.subr.mxu0 0.0
    %661 = vmatpush1.msra.mxu0 %v636
    %662 = vmatprep.subr.mxu0 0.0
    %663 = vmatpush1.msra.mxu0 %v637
    %664 = vmatprep.subr.mxu0 0.0
    %665 = vmatpush1.msra.mxu0 %v638
    %666 = vmatprep.subr.mxu0 0.0
    %667 = vmatpush1.msra.mxu0 %v639
    %668 = vmatprep.subr.mxu0 0.0
    %669 = vmatpush1.msra.mxu0 %v640
    %670 = vmatprep.subr.mxu0 0.0
    %671 = vmatpush1.msra.mxu0 %v641
    %672 = vmatprep.subr.mxu0 0.0
    %673 = vmatpush1.msra.mxu0 %v642
    %674 = vmatprep.subr.mxu0 0.0
    %675 = vmatpush1.msra.mxu0 %v643
    %676 = vmatprep.subr.mxu0 0.0
    %677 = vmatpush1.msra.mxu0 0.0
    %678 = vmatprep.subr.mxu0 0.0
    %679 = vmatpush1.msra.mxu0 0.0
    %680 = vmatprep.subr.mxu0 0.0
    %681 = vmatpush1.msra.mxu0 0.0
    %682 = vmatprep.subr.mxu0 0.0
    %683 = vmatpush1.msra.mxu0 0.0
    %684 = vmatprep.subr.mxu0 0.0
    %685 = vmatpush1.msra.mxu0 0.0
    %686 = vmatprep.subr.mxu0 0.0
    %687 = vmatpush1.msra.mxu0 0.0
    %688 = vmatprep.subr.mxu0 0.0
    %689 = vmatpush1.msra.mxu0 0.0
    %690 = vmatprep.subr.mxu0 0.0
    %691 = vmatpush1.msra.mxu0 0.0
    %692 = vmatprep.subr.mxu0 0.0
    %693 = vmatpush1.msra.mxu0 0.0
    %694 = vmatprep.subr.mxu0 0.0
    %695 = vmatpush1.msra.mxu0 0.0
    %696 = vmatprep.subr.mxu0 0.0
    %697 = vmatpush1.msra.mxu0 0.0
    %698 = vmatprep.subr.mxu0 0.0
    %699 = vmatpush1.msra.mxu0 0.0
    %700 = vmatprep.subr.mxu0 0.0
    %701 = vmatpush1.msra.mxu0 0.0
    %702 = vmatprep.subr.mxu0 0.0
    %703 = vmatpush1.msra.mxu0 0.0
    %704 = vmatprep.subr.mxu0 0.0
    %705 = vmatpush1.msra.mxu0 0.0
    %706 = vmatprep.subr.mxu0 0.0
    %707 = vmatpush1.msra.mxu0 0.0
    %708 = vmatprep.mubr.f32.mxu0 0.0
    %709 = vmatmul.mubr.f32.gmra.mrb[0].mxu0 %v455
    %v710 = vpop.f32.mrb[0].mxu0
    %v711 = vadd.f32 0.0, %v710
    %v712 = vpop.f32.mrb[0].mxu0
    %713 = vdwg.mxu0
    %v714 = vld [vmem:[#allocation12] sm:$0xff]
    %v715 = vld [vmem:[#allocation12 + $0x8] sm:$0xff]
    %v716 = vld [vmem:[#allocation12 + $0x10] sm:$0xff]
    %v717 = vld [vmem:[#allocation12 + $0x18] sm:$0xff]
    %v718 = vld [vmem:[#allocation12 + $0x20] sm:$0xff]
    %v719 = vld [vmem:[#allocation12 + $0x28] sm:$0xff]
    %v720 = vld [vmem:[#allocation12 + $0x30] sm:$0xff]
    %v721 = vld [vmem:[#allocation12 + $0x38] sm:$0xff]
    %v722 = vld [vmem:[#allocation12 + $0x40] sm:$0xff]
    %v723 = vld [vmem:[#allocation12 + $0x48] sm:$0xff]
    %v724 = vld [vmem:[#allocation12 + $0x50] sm:$0xff]
    %v725 = vld [vmem:[#allocation12 + $0x58] sm:$0xff]
    %v726 = vld [vmem:[#allocation12 + $0x60] sm:$0xff]
    %v727 = vld [vmem:[#allocation12 + $0x68] sm:$0xff]
    %v728 = vld [vmem:[#allocation12 + $0x70] sm:$0xff]
    %v729 = vld [vmem:[#allocation12 + $0x78] sm:$0xff]
    %v730 = vld [vmem:[#allocation13] sm:$0x1]
    %v732 = vlaneseq
    %v733 = vshrl.u32 %v732, 7
    %v734 = vsub.s32 0, %v733
    %v735 = vrot.slane %v730, %v734
    %737 = vmatprep.subr.mxu0 0.0
    %738 = vmatpush1.msra.mxu0 %v714
    %739 = vmatprep.subr.mxu0 0.0
    %740 = vmatpush1.msra.mxu0 %v715
    %741 = vmatprep.subr.mxu0 0.0
    %742 = vmatpush1.msra.mxu0 %v716
    %743 = vmatprep.subr.mxu0 0.0
    %744 = vmatpush1.msra.mxu0 %v717
    %745 = vmatprep.subr.mxu0 0.0
    %746 = vmatpush1.msra.mxu0 %v718
    %747 = vmatprep.subr.mxu0 0.0
    %748 = vmatpush1.msra.mxu0 %v719
    %749 = vmatprep.subr.mxu0 0.0
    %750 = vmatpush1.msra.mxu0 %v720
    %751 = vmatprep.subr.mxu0 0.0
    %752 = vmatpush1.msra.mxu0 %v721
    %753 = vmatprep.subr.mxu0 0.0
    %754 = vmatpush1.msra.mxu0 %v722
    %755 = vmatprep.subr.mxu0 0.0
    %756 = vmatpush1.msra.mxu0 %v723
    %757 = vmatprep.subr.mxu0 0.0
    %758 = vmatpush1.msra.mxu0 %v724
    %759 = vmatprep.subr.mxu0 0.0
    %760 = vmatpush1.msra.mxu0 %v725
    %761 = vmatprep.subr.mxu0 0.0
    %762 = vmatpush1.msra.mxu0 %v726
    %763 = vmatprep.subr.mxu0 0.0
    %764 = vmatpush1.msra.mxu0 %v727
    %765 = vmatprep.subr.mxu0 0.0
    %766 = vmatpush1.msra.mxu0 %v728
    %767 = vmatprep.subr.mxu0 0.0
    %768 = vmatpush1.msra.mxu0 %v729
    %769 = vmatprep.subr.mxu0 0.0
    %770 = vmatpush1.msra.mxu0 0.0
    %771 = vmatprep.subr.mxu0 0.0
    %772 = vmatpush1.msra.mxu0 0.0
    %773 = vmatprep.subr.mxu0 0.0
    %774 = vmatpush1.msra.mxu0 0.0
    %775 = vmatprep.subr.mxu0 0.0
    %776 = vmatpush1.msra.mxu0 0.0
    %777 = vmatprep.subr.mxu0 0.0
    %778 = vmatpush1.msra.mxu0 0.0
    %779 = vmatprep.subr.mxu0 0.0
    %780 = vmatpush1.msra.mxu0 0.0
    %781 = vmatprep.subr.mxu0 0.0
    %782 = vmatpush1.msra.mxu0 0.0
    %783 = vmatprep.subr.mxu0 0.0
    %784 = vmatpush1.msra.mxu0 0.0
    %785 = vmatprep.subr.mxu0 0.0
    %786 = vmatpush1.msra.mxu0 0.0
    %787 = vmatprep.subr.mxu0 0.0
    %788 = vmatpush1.msra.mxu0 0.0
    %789 = vmatprep.subr.mxu0 0.0
    %790 = vmatpush1.msra.mxu0 0.0
    %791 = vmatprep.subr.mxu0 0.0
    %792 = vmatpush1.msra.mxu0 0.0
    %793 = vmatprep.subr.mxu0 0.0
    %794 = vmatpush1.msra.mxu0 0.0
    %795 = vmatprep.subr.mxu0 0.0
    %796 = vmatpush1.msra.mxu0 0.0
    %797 = vmatprep.subr.mxu0 0.0
    %798 = vmatpush1.msra.mxu0 0.0
    %799 = vmatprep.subr.mxu0 0.0
    %800 = vmatpush1.msra.mxu0 0.0
    %801 = vmatprep.mubr.f32.mxu0 0.0
    %802 = vmatmul.mubr.f32.gmra.mrb[0].mxu0 %v711
    %v803 = vpop.f32.mrb[0].mxu0
    %v804 = vadd.f32 %v735, %v803
    %v805 = vpop.f32.mrb[0].mxu0
    %806 = vdwg.mxu0
    %v807 = vmax.f32 %v804, 0.0
    %v808 = vand.u32 2147483647, %v804
    %v809 = vsub.f32 0.0, %v808
    %v810 = vmul.f32 %v809, 1.442695
    %v811 = vpow.pop %v810
    %v812 = vadd.f32 %v811, 1.0
    %v813 = vlog2.pop %v812
    %v814 = vmul.f32 %v813, 0.6931472
    %v815 = vadd.f32 %v807, %v814
    %v818 = vunpack.c.l.s4 1966171168
    %v819 = vunpack.c.0.s8 %v818
    %v820 = vlaneseq
    %v821 = vshrl.u32 %v820, 7
    %v822 = vsub.s32 %v819, %v821
    %v823 = vrot.slane %v815, %v822
    %v824 = vcombine.high %v823, %v823
    %v826 = vunpack.c.l.s4 1966171168
    %v827 = vunpack.c.0.s8 %v826
    %v828 = vlaneseq
    %v829 = vshrl.u32 %v828, 7
    %v830 = vsub.s32 %v827, %v829
    %v831 = vrot.slane %v823, %v830
    %v833 = vunpack.c.l.s4 1966171168
    %v834 = vunpack.c.0.s8 %v833
    %v835 = vlaneseq
    %v836 = vshrl.u32 %v835, 7
    %v837 = vsub.s32 %v834, %v836
    %v838 = vrot.slane %v824, %v837
    %v839 = vld [vmem:[#allocation15] sm:$0xff]
    %v840 = vld [vmem:[#allocation15 + $0x8] sm:$0xff]
    %v841 = vlaneseq
    %v842 = vshrl.u32 %v841, 7
    %v843 = vsub.s32 0, %v842
    %v844 = vrot.slane %v831, %v843
    %v845 = vlaneseq
    %v846 = vshrl.u32 %v845, 7
    %v847 = vsub.s32 0, %v846
    %v848 = vrot.slane %v838, %v847
    %v851 = vmul.f32 %v844, %v839
    %v852 = vmul.f32 %v844, %v840
    %v853 = vmul.f32 %v848, %v839
    %v854 = vmul.f32 %v848, %v840
    %v855 = vmul.f32 %v851, 1.442695
    %v856 = vpow.pop %v855
    %v857 = vmul.f32 %v852, 1.442695
    %v858 = vpow.pop %v857
    %v859 = vmul.f32 %v853, 1.442695
    %v860 = vpow.pop %v859
    %v861 = vmul.f32 %v854, 1.442695
    %v862 = vpow.pop %v861
    %v863 = vmul.f32 %v815, %v455
    %v864 = vmul.f32 %v856, %v186
    %v865 = vmul.f32 %v858, %v187
    %v866 = vmul.f32 %v860, %v188
    %v867 = vmul.f32 %v862, %v189
    %v868 = vlaneseq
    %v869 = vshrl.u32 %v868, 7
    %v870 = vsub.s32 0, %v869
    %v871 = vrot.slane %v539, %v870
    %873 = vbcast.lane.b32.xlu0 %v871, 256
    %v874 = vpop.permute.xlu0 %873
    %s876 = sor.u32 256, 8
    %877 = vbcast.lane.b32.xlu0 %v871, %s876
    %v878 = vpop.permute.xlu0 %877
    %v879 = vlaneseq
    %v880 = vshrl.u32 %v879, 7
    %v881 = vsub.s32 1, %v880
    %v882 = vrot.slane %v539, %v881
    %884 = vbcast.lane.b32.xlu0 %v882, 256
    %v885 = vpop.permute.xlu0 %884
    %s887 = sor.u32 256, 8
    %888 = vbcast.lane.b32.xlu0 %v882, %s887
    %v889 = vpop.permute.xlu0 %888
    %v892 = vunpack.c.l.s4 1966171168
    %v893 = vunpack.c.0.s8 %v892
    %v894 = vlaneseq
    %v895 = vshrl.u32 %v894, 7
    %v896 = vsub.s32 %v893, %v895
    %v897 = vrot.slane %v863, %v896
    %v898 = vcombine.high %v897, %v897
    %v900 = vunpack.c.l.s4 1966171168
    %v901 = vunpack.c.0.s8 %v900
    %v902 = vlaneseq
    %v903 = vshrl.u32 %v902, 7
    %v904 = vsub.s32 %v901, %v903
    %v905 = vrot.slane %v897, %v904
    %v907 = vunpack.c.l.s4 1966171168
    %v908 = vunpack.c.0.s8 %v907
    %v909 = vlaneseq
    %v910 = vshrl.u32 %v909, 7
    %v911 = vsub.s32 %v908, %v910
    %v912 = vrot.slane %v898, %v911
    %v913 = vlaneseq
    %v914 = vshrl.u32 %v913, 7
    %v915 = vsub.s32 0, %v914
    %v916 = vrot.slane %v905, %v915
    %v917 = vlaneseq
    %v918 = vshrl.u32 %v917, 7
    %v919 = vsub.s32 0, %v918
    %v920 = vrot.slane %v912, %v919
    %v923 = vmul.f32 %v874, %v916
    %v924 = vmul.f32 %v878, %v916
    %v925 = vmul.f32 %v885, %v920
    %v926 = vmul.f32 %v889, %v920
    %v927 = vadd.f32 %v864, %v923
    %v928 = vadd.f32 %v865, %v924
    %v929 = vadd.f32 %v866, %v925
    %v930 = vadd.f32 %v867, %v926
    %v931 = vlaneseq
    %v932 = vshrl.u32 %v931, 7
    %v933 = vsub.s32 0, %v932
    %v934 = vrot.slane %v625, %v933
    %936 = vbcast.lane.b32.xlu0 %v934, 256
    %v937 = vpop.permute.xlu0 %936
    %s939 = sor.u32 256, 8
    %940 = vbcast.lane.b32.xlu0 %v934, %s939
    %v941 = vpop.permute.xlu0 %940
    %v942 = vlaneseq
    %v943 = vshrl.u32 %v942, 7
    %v944 = vsub.s32 1, %v943
    %v945 = vrot.slane %v625, %v944
    %947 = vbcast.lane.b32.xlu0 %v945, 256
    %v948 = vpop.permute.xlu0 %947
    %s950 = sor.u32 256, 8
    %951 = vbcast.lane.b32.xlu0 %v945, %s950
    %v952 = vpop.permute.xlu0 %951
    %v953 = vmul.f32 %v927, %v937
    %v954 = vmul.f32 %v928, %v941
    %v955 = vmul.f32 %v929, %v948
    %v956 = vmul.f32 %v930, %v952
    %v957 = vadd.f32 %v953, %v954
    %v958 = vrot.slane %v957, 4
    %v959 = vadd.f32 %v957, %v958
    %v960 = vrot.slane %v959, 2
    %v961 = vadd.f32 %v959, %v960
    %v962 = vrot.slane %v961, 1
    %v963 = vadd.f32 %v961, %v962
    %v964 = vadd.f32 %v955, %v956
    %v965 = vrot.slane %v964, 4
    %v966 = vadd.f32 %v964, %v965
    %v967 = vrot.slane %v966, 2
    %v968 = vadd.f32 %v966, %v967
    %v969 = vrot.slane %v968, 1
    %v970 = vadd.f32 %v968, %v969
    %v971 = vld [vmem:[#allocation16] sm:$0x1]
    %v973 = vlaneseq
    %v974 = vshrl.u32 %v973, 7
    %v975 = vsub.s32 0, %v974
    %v976 = vrot.slane %v971, %v975
    %v978 = vmul.f32 %v976, %v455
    %v980 = vrot.slane %v978, 1
    %v983 = vadd.f32 %v963, %v978
    %v984 = vadd.f32 %v970, %v980
    %v985 = vsub.f32 0.0, %v396
    %v986 = vmul.f32 %v985, 1.442695
    %v987 = vpow.pop %v986
    %v988 = vadd.f32 %v987, 1.0
    %v989 = vrcp.pop %v988
    %v990 = vmul.f32 %v396, %v989
    %v992 = vrot.slane %v990, 1
    %v995 = vmul.f32 %v983, %v990
    %v996 = vmul.f32 %v984, %v992
    %v997 = vld [vmem:[#allocation18] sm:$0xff]
    %v998 = vld [vmem:[#allocation18 + $0x8] sm:$0xff]
    %v999 = vld [vmem:[#allocation18 + $0x10] sm:$0xff]
    %v1000 = vld [vmem:[#allocation18 + $0x18] sm:$0xff]
    %v1001 = vld [vmem:[#allocation18 + $0x20] sm:$0xff]
    %v1002 = vld [vmem:[#allocation18 + $0x28] sm:$0xff]
    %v1003 = vld [vmem:[#allocation18 + $0x30] sm:$0xff]
    %v1004 = vld [vmem:[#allocation18 + $0x38] sm:$0xff]
    %v1005 = vld [vmem:[#allocation18 + $0x40] sm:$0xff]
    %v1006 = vld [vmem:[#allocation18 + $0x48] sm:$0xff]
    %v1007 = vld [vmem:[#allocation18 + $0x50] sm:$0xff]
    %v1008 = vld [vmem:[#allocation18 + $0x58] sm:$0xff]
    %v1009 = vld [vmem:[#allocation18 + $0x60] sm:$0xff]
    %v1010 = vld [vmem:[#allocation18 + $0x68] sm:$0xff]
    %v1011 = vld [vmem:[#allocation18 + $0x70] sm:$0xff]
    %v1012 = vld [vmem:[#allocation18 + $0x78] sm:$0xff]
    %v1015 = vrot.slane %v996, 7
    %v1016 = vsel %vm421, %v1015, %v995
    %1018 = vmatprep.subr.mxu0 0.0
    %1019 = vmatpush1.msra.mxu0 %v997
    %1020 = vmatprep.subr.mxu0 0.0
    %1021 = vmatpush1.msra.mxu0 %v998
    %1022 = vmatprep.subr.mxu0 0.0
    %1023 = vmatpush1.msra.mxu0 %v999
    %1024 = vmatprep.subr.mxu0 0.0
    %1025 = vmatpush1.msra.mxu0 %v1000
    %1026 = vmatprep.subr.mxu0 0.0
    %1027 = vmatpush1.msra.mxu0 %v1001
    %1028 = vmatprep.subr.mxu0 0.0
    %1029 = vmatpush1.msra.mxu0 %v1002
    %1030 = vmatprep.subr.mxu0 0.0
    %1031 = vmatpush1.msra.mxu0 %v1003
    %1032 = vmatprep.subr.mxu0 0.0
    %1033 = vmatpush1.msra.mxu0 %v1004
    %1034 = vmatprep.subr.mxu0 0.0
    %1035 = vmatpush1.msra.mxu0 %v1005
    %1036 = vmatprep.subr.mxu0 0.0
    %1037 = vmatpush1.msra.mxu0 %v1006
    %1038 = vmatprep.subr.mxu0 0.0
    %1039 = vmatpush1.msra.mxu0 %v1007
    %1040 = vmatprep.subr.mxu0 0.0
    %1041 = vmatpush1.msra.mxu0 %v1008
    %1042 = vmatprep.subr.mxu0 0.0
    %1043 = vmatpush1.msra.mxu0 %v1009
    %1044 = vmatprep.subr.mxu0 0.0
    %1045 = vmatpush1.msra.mxu0 %v1010
    %1046 = vmatprep.subr.mxu0 0.0
    %1047 = vmatpush1.msra.mxu0 %v1011
    %1048 = vmatprep.subr.mxu0 0.0
    %1049 = vmatpush1.msra.mxu0 %v1012
    %1050 = vmatprep.subr.mxu0 0.0
    %1051 = vmatpush1.msra.mxu0 0.0
    %1052 = vmatprep.subr.mxu0 0.0
    %1053 = vmatpush1.msra.mxu0 0.0
    %1054 = vmatprep.subr.mxu0 0.0
    %1055 = vmatpush1.msra.mxu0 0.0
    %1056 = vmatprep.subr.mxu0 0.0
    %1057 = vmatpush1.msra.mxu0 0.0
    %1058 = vmatprep.subr.mxu0 0.0
    %1059 = vmatpush1.msra.mxu0 0.0
    %1060 = vmatprep.subr.mxu0 0.0
    %1061 = vmatpush1.msra.mxu0 0.0
    %1062 = vmatprep.subr.mxu0 0.0
    %1063 = vmatpush1.msra.mxu0 0.0
    %1064 = vmatprep.subr.mxu0 0.0
    %1065 = vmatpush1.msra.mxu0 0.0
    %1066 = vmatprep.subr.mxu0 0.0
    %1067 = vmatpush1.msra.mxu0 0.0
    %1068 = vmatprep.subr.mxu0 0.0
    %1069 = vmatpush1.msra.mxu0 0.0
    %1070 = vmatprep.subr.mxu0 0.0
    %1071 = vmatpush1.msra.mxu0 0.0
    %1072 = vmatprep.subr.mxu0 0.0
    %1073 = vmatpush1.msra.mxu0 0.0
    %1074 = vmatprep.subr.mxu0 0.0
    %1075 = vmatpush1.msra.mxu0 0.0
    %1076 = vmatprep.subr.mxu0 0.0
    %1077 = vmatpush1.msra.mxu0 0.0
    %1078 = vmatprep.subr.mxu0 0.0
    %1079 = vmatpush1.msra.mxu0 0.0
    %1080 = vmatprep.subr.mxu0 0.0
    %1081 = vmatpush1.msra.mxu0 0.0
    %1082 = vmatprep.mubr.f32.mxu0 0.0
    %1083 = vmatmul.mubr.f32.gmra.mrb[0].mxu0 %v1016
    %v1084 = vpop.f32.mrb[0].mxu0
    %v1085 = vadd.f32 %v275, %v1084
    %v1086 = vpop.f32.mrb[0].mxu0
    %1087 = vdwg.mxu0
    %1088 = vst [vmem:[#allocation19] sm:$0x3] %v1085
    %1089 = vst [vmem:[#allocation2] sm:$0xff] %v927
    %1090 = vst [vmem:[#allocation2 + $0x8] sm:$0xff] %v928
    %1091 = vst [vmem:[#allocation2 + $0x10] sm:$0xff] %v929
    %1092 = vst [vmem:[#allocation2 + $0x18] sm:$0xff] %v930
    %1093 = vst [vmem:[#allocation3 - $0x1] sm:$0x6] %v190
    %1094 = vst [vmem:[#allocation3 + $0x3] sm:$0x6] %v191
    %v1097 = vunpack.c.l.s4 1966171168
    %v1098 = vunpack.c.0.s8 %v1097
    %v1099 = vlaneseq
    %v1100 = vshrl.u32 %v1099, 7
    %v1101 = vsub.s32 %v1098, %v1100
    %v1102 = vrot.slane %v394, %v1101
    %v1103 = vcombine.high %v1102, %v1102
    %v1105 = vunpack.c.l.s4 1966171168
    %v1106 = vunpack.c.0.s8 %v1105
    %v1107 = vlaneseq
    %v1108 = vshrl.u32 %v1107, 7
    %v1109 = vsub.s32 %v1106, %v1108
    %v1110 = vrot.slane %v1102, %v1109
    %v1112 = vunpack.c.l.s4 1966171168
    %v1113 = vunpack.c.0.s8 %v1112
    %v1114 = vlaneseq
    %v1115 = vshrl.u32 %v1114, 7
    %v1116 = vsub.s32 %v1113, %v1115
    %v1117 = vrot.slane %v1103, %v1116
    %1120 = vst [vmem:[#allocation3 + $0x2] sm:$0x1] %v1110
    %1121 = vst [vmem:[#allocation3 + $0x6] sm:$0x1] %v1117
    // Predicated region
    $region106: #{tpu_custom_call.1} parent=1 // pred_check
      %p1122 = pneg %p169
    $region107: #{tpu_custom_call.1} parent=1 // pred_check_branch
      %1124 = sbr.rel (%p1122) target = $region109
    $region108: #{tpu_custom_call.1} parent=1 // pred_region
      %v1125 = vld [vmem:[#allocation2] sm:$0xff]
      %v1126 = vld [vmem:[#allocation2 + $0x8] sm:$0xff]
      %v1127 = vld [vmem:[#allocation2 + $0x10] sm:$0xff]
      %v1128 = vld [vmem:[#allocation2 + $0x18] sm:$0xff]
      %1129 = vst [vmem:[%s17] sm:$0xff] %v1125
      %1130 = vst [vmem:[%s17 + $0x8] sm:$0xff] %v1126
      %1131 = vst [vmem:[%s17 + $0x10] sm:$0xff] %v1127
      %1132 = vst [vmem:[%s17 + $0x18] sm:$0xff] %v1128
      %v1133 = vld [vmem:[#allocation3] sm:$0x7]
      %v1134 = vld [vmem:[#allocation3 + $0x4] sm:$0x7]
      %1135 = vst [vmem:[%s18] sm:$0x7] %v1133
      %1136 = vst [vmem:[%s18 + $0x4] sm:$0x7] %v1134
    $region109: #{tpu_custom_call.1} parent=1 // pred_fallthru
      _
    // Predicated region
    $region110: #{tpu_custom_call.1} parent=1 // pred_check
      _
    $region111: #{tpu_custom_call.1} parent=1 // pred_check_branch
      %1138 = sbr.rel (0) target = $region113
    $region112: #{tpu_custom_call.1} parent=1 // pred_region
      %s1140 = ssub.s32 32, 32
      %1141 = vsyncadd [#allocation6], %s1140
      %s1143 = sshll.u32 [#allocation19], 4
      %s1144 = int_to_ptr.vmem [resolvable:$true] %s1143
      %1146 = dma.vmem_to_hbm [thread:$0]  %s1144, 32, %s16, [#allocation6]
    $region113: #{tpu_custom_call.1} parent=1 // pred_fallthru
      _
    // Predicated region
    $region114: #{tpu_custom_call.1} parent=1 // pred_check
      _
    $region115: #{tpu_custom_call.1} parent=1 // pred_check_branch
      %1148 = sbr.rel (0) target = $region117
    $region116: #{tpu_custom_call.1} parent=1 // pred_region
      _
    $region117: #{tpu_custom_call.1} parent=1 // pred_fallthru
      _
    // Predicated region
    $region118: #{tpu_custom_call.1} parent=1 // pred_check
      _
    $region119: #{tpu_custom_call.1} parent=1 // pred_check_branch
      %1150 = sbr.rel (0) target = $region121
    $region120: #{tpu_custom_call.1} parent=1 // pred_region
      _
    $region121: #{tpu_custom_call.1} parent=1 // pred_fallthru
      _
    // Predicated region
    $region122: #{tpu_custom_call.1} parent=1 // pred_check
      _
    $region123: #{tpu_custom_call.1} parent=1 // pred_check_branch
      %1152 = sbr.rel (0) target = $region125
    $region124: #{tpu_custom_call.1} parent=1 // pred_region
      %1153 = dma.done [#allocation6], 32
    $region125: #{tpu_custom_call.1} parent=1 // pred_fallthru
      _
    // Predicated region
    $region126: #{tpu_custom_call.1} parent=1 // pred_check
      _
    $region127: #{tpu_custom_call.1} parent=1 // pred_check_branch
      %1155 = sbr.rel (0) target = $region129
    $region128: #{tpu_custom_call.1} parent=1 // pred_region
      _
    $region129: #{tpu_custom_call.1} parent=1 // pred_fallthru
      _
    // Predicated region
    $region130: #{tpu_custom_call.1} parent=1 // pred_check
      _
    $region131: #{tpu_custom_call.1} parent=1 // pred_check_branch
      %1157 = sbr.rel (0) target = $region133
    $region132: #{tpu_custom_call.1} parent=1 // pred_region
      _
    $region133: #{tpu_custom_call.1} parent=1 // pred_fallthru
      _
    %1158 = vsyncpa [#allocation5], 1
    %1159 = vsyncpa [#allocation8], 1
    %1160 = vsyncpa [#allocation11], 1
    %1161 = vsyncpa [#allocation14], 1
    %1162 = vsyncpa [#allocation17], 1
    %1163 = vsyncpa [#allocation6], 1

</llo_original>
